<compile_context>
chip_gen: v7x
topology: tpu7x:2x2x1
jax: 0.10.0
libtpu: 0.0.40
codegen_flags: <defaults>
</compile_context>

<pallas_src>
import functools
import math

import jax
import jax.numpy as jnp
import numpy as np
from jax import lax
from jax.experimental import pallas as pl
from jax.experimental.pallas import tpu as pltpu


def _round_up(x, m):
    return ((x + m - 1) // m) * m


def _bert_output_kernel(h_ref, res_ref, w_ref, p_ref, o_ref, *, eps, inv_h):
    # h:   (TM, I)  f32 (or bf16) activation tile -- cast to bf16 here, on the VPU
    # res: (TM, H)  residual tile (any float dtype; upcast to f32 for LN math)
    # w:   (I,  H)  bf16 dense weight, VMEM-resident across the grid
    # p:   (3,  H)  f32 packed [bias; gamma; beta], VMEM-resident
    h = h_ref[...].astype(jnp.bfloat16)
    y = jnp.dot(h, w_ref[...], preferred_element_type=jnp.float32)     # MXU, f32 acc
    p = p_ref[...]
    bias, gamma, beta = p[0:1, :], p[1:2, :], p[2:3, :]
    y = y + bias + res_ref[...].astype(jnp.float32)
    # One-pass LayerNorm statistics: var = E[x^2] - mean^2 (single reduction pass).
    mean = jnp.sum(y, axis=-1, keepdims=True) * inv_h
    ex2 = jnp.sum(y * y, axis=-1, keepdims=True) * inv_h
    var = jnp.maximum(ex2 - mean * mean, 0.0)
    inv = lax.rsqrt(var + eps)                                          # EUP
    o_ref[...] = ((y - mean) * inv * gamma + beta).astype(o_ref.dtype)


def prepare_params(dense_w, dense_b, ln_gamma, ln_beta):
    """One-time parameter prep (do at parameter-load time, NOT per forward call):
    transpose + bf16-cast the dense weight for the MXU, and pack the three
    per-channel vectors into a single (3, H) f32 resident operand."""
    w_t = jnp.asarray(dense_w).T.astype(jnp.bfloat16)                   # (I, H)
    packed = jnp.stack([jnp.asarray(dense_b, jnp.float32),
                        jnp.asarray(ln_gamma, jnp.float32),
                        jnp.asarray(ln_beta, jnp.float32)], axis=0)     # (3, H)
    return w_t, packed


def protein_bert_output(hidden_states, input_tensor, w_t, packed_params, *,
                        eps=1e-12, tile_m=512, out_dtype=None):
    """hidden_states: (..., I); input_tensor: (..., H); returns (..., H)."""
    out_nd_shape = input_tensor.shape
    I, H = w_t.shape
    if out_dtype is None:
        out_dtype = input_tensor.dtype

    h2 = hidden_states.reshape(-1, I)      # no cast, no pad in the wrapper
    r2 = input_tensor.reshape(-1, H)
    M = h2.shape[0]

    # Row tile: large to amortize per-grid-step overhead, 16-row aligned, but split
    # small problems into >=2 tiles so "parallel" can use both v7x TensorCores.
    tm = min(int(tile_m), _round_up(M, 16))
    if M <= tm and M > 16:
        tm = _round_up(pl.cdiv(M, 2), 16)
    grid = (pl.cdiv(M, tm),)

    # Explicit VMEM budget: double-buffered activation/residual/output tiles plus
    # resident weight / packed params (x2 in case single-buffering is unavailable).
    vmem_bytes = (2 * tm * I * h2.dtype.itemsize
                  + 2 * tm * H * r2.dtype.itemsize
                  + 2 * tm * H * np.dtype(out_dtype).itemsize
                  + 2 * I * H * 2
                  + 2 * 8 * max(H, 128) * 4)
    vmem_limit = int(max(32 << 20, min(2 * vmem_bytes, 64 << 20)))

    def call(single_buffer_resident):
        resident_kw = (dict(pipeline_mode=pl.Buffered(1))
                       if single_buffer_resident else {})
        return pl.pallas_call(
            functools.partial(_bert_output_kernel, eps=float(eps), inv_h=1.0 / H),
            out_shape=jax.ShapeDtypeStruct((M, H), out_dtype),
            grid=grid,
            in_specs=[
                pl.BlockSpec((tm, I), lambda i: (i, 0)),                  # activations (row-tiled)
                pl.BlockSpec((tm, H), lambda i: (i, 0)),                  # residual (row-tiled)
                pl.BlockSpec((I, H), lambda i: (0, 0), **resident_kw),    # dense weight (resident)
                pl.BlockSpec((3, H), lambda i: (0, 0), **resident_kw),    # bias/gamma/beta (resident)
            ],
            out_specs=pl.BlockSpec((tm, H), lambda i: (i, 0)),
            compiler_params=pltpu.CompilerParams(
                dimension_semantics=("parallel",),
                vmem_limit_bytes=vmem_limit),
        )(h2, r2, w_t, packed_params)

    try:
        out = call(True)
    except Exception:
        # pipeline_mode=pl.Buffered(1) is only a VMEM-footprint hint; fall back to the
        # default double-buffered resident operands if this JAX build rejects it.
        out = call(False)

    return out.reshape(out_nd_shape)


def _init_linear(key, in_dim, out_dim):
    """PyTorch nn.Linear default init: U(-1/sqrt(in), 1/sqrt(in))."""
    kw, kb = jax.random.split(key)
    bound = 1.0 / math.sqrt(in_dim)
    w = jax.random.uniform(kw, (out_dim, in_dim), jnp.float32, -bound, bound)
    b = jax.random.uniform(kb, (out_dim,), jnp.float32, -bound, bound)
    return w, b


if __name__ == "__main__":
    # Small BERT-like config: hidden_size=128 (lane-dense), intermediate_size=512 (4x).
    batch, seq = 2, 16
    hidden_size = 128
    intermediate_size = 512
    eps = 1e-12

    key = jax.random.PRNGKey(0)
    k_h, k_r, k_lin, k_g, k_b = jax.random.split(key, 5)

    hidden_states = jax.random.normal(k_h, (batch, seq, intermediate_size), jnp.float32)
    input_tensor = jax.random.normal(k_r, (batch, seq, hidden_size), jnp.float32)

    dense_w, dense_b = _init_linear(k_lin, intermediate_size, hidden_size)  # (128, 512), (128,)
    ln_gamma = 1.0 + 0.1 * jax.random.normal(k_g, (hidden_size,), jnp.float32)
    ln_beta = 0.1 * jax.random.normal(k_b, (hidden_size,), jnp.float32)

    # One-time parameter prep (weight transpose + bf16, pack bias/gamma/beta).
    w_t, packed = prepare_params(dense_w, dense_b, ln_gamma, ln_beta)

    out = protein_bert_output(hidden_states, input_tensor, w_t, packed, eps=eps)
    out = jax.block_until_ready(out)

    # Pure-JAX f32 reference (dense -> dropout(identity) -> residual -> LayerNorm).
    ref_y = hidden_states @ dense_w.T + dense_b + input_tensor
    mean = jnp.mean(ref_y, axis=-1, keepdims=True)
    var = jnp.mean(jnp.square(ref_y - mean), axis=-1, keepdims=True)
    ref = (ref_y - mean) * lax.rsqrt(var + eps) * ln_gamma + ln_beta

    assert out.shape == (batch, seq, hidden_size)
    # bf16 MXU operands with f32 accumulation -> loosened tolerance vs pure-f32 reference.
    err = float(jnp.max(jnp.abs(out - ref)))
    assert jnp.allclose(out, ref, atol=2e-2, rtol=2e-2), err
    print("KERNEL_OK")
</pallas_src>

<mosaic_0001>
module attributes {stable_mosaic.version = 11 : i64} {
  func.func @_bert_output_kernel(%arg0: i32, %arg1: memref<16x512xf32, #tpu.memory_space<vmem>>, %arg2: memref<16x128xf32, #tpu.memory_space<vmem>>, %arg3: memref<512x128xbf16, #tpu.memory_space<vmem>>, %arg4: memref<3x128xf32, #tpu.memory_space<vmem>>, %arg5: memref<16x128xf32, #tpu.memory_space<vmem>>) attributes {dimension_semantics = [#tpu.dimension_semantics<parallel>], iteration_bounds = array<i64: 2>, scalar_prefetch = 0 : i64, scratch_operands = 0 : i64, tpu.core_type = #tpu.core_type<tc>, window_params = [{transform_indices = @transform_0, window_bounds = array<i64: 16, 512>}, {transform_indices = @transform_1, window_bounds = array<i64: 16, 128>}, {pipeline_mode = #tpu.pipeline_mode<synchronous>, transform_indices = @transform_2, window_bounds = array<i64: 512, 128>}, {pipeline_mode = #tpu.pipeline_mode<synchronous>, transform_indices = @transform_3, window_bounds = array<i64: 3, 128>}, {transform_indices = @transform_4, window_bounds = array<i64: 16, 128>}]} {
    %c0 = arith.constant 0 : index
    %c0_0 = arith.constant 0 : index
    %0 = vector.load %arg1[%c0, %c0_0] : memref<16x512xf32, #tpu.memory_space<vmem>>, vector<16x512xf32>
    %1 = arith.truncf %0 : vector<16x512xf32> to vector<16x512xbf16>
    %c0_1 = arith.constant 0 : index
    %c0_2 = arith.constant 0 : index
    %2 = vector.load %arg3[%c0_1, %c0_2] : memref<512x128xbf16, #tpu.memory_space<vmem>>, vector<512x128xbf16>
    %cst = arith.constant dense<0.000000e+00> : vector<16x128xf32>
    %3 = tpu.matmul %1, %2, %cst {dimension_numbers = #tpu.dot_dimension_numbers<[1], [0], [0], [1], [0, 0, 1, 1], [], []>} : vector<16x512xbf16>, vector<512x128xbf16>, vector<16x128xf32> -> vector<16x128xf32>
    %c0_3 = arith.constant 0 : index
    %c0_4 = arith.constant 0 : index
    %4 = vector.load %arg4[%c0_3, %c0_4] : memref<3x128xf32, #tpu.memory_space<vmem>>, vector<3x128xf32>
    %5 = vector.extract_strided_slice %4 {offsets = [0, 0], sizes = [1, 128], strides = [1, 1]} : vector<3x128xf32> to vector<1x128xf32>
    %6 = vector.extract_strided_slice %4 {offsets = [1, 0], sizes = [1, 128], strides = [1, 1]} : vector<3x128xf32> to vector<1x128xf32>
    %7 = vector.extract_strided_slice %4 {offsets = [2, 0], sizes = [1, 128], strides = [1, 1]} : vector<3x128xf32> to vector<1x128xf32>
    %8 = vector.broadcast %5 : vector<1x128xf32> to vector<16x128xf32>
    %9 = arith.addf %3, %8 : vector<16x128xf32>
    %c0_5 = arith.constant 0 : index
    %c0_6 = arith.constant 0 : index
    %10 = vector.load %arg2[%c0_5, %c0_6] : memref<16x128xf32, #tpu.memory_space<vmem>>, vector<16x128xf32>
    %11 = arith.addf %9, %10 : vector<16x128xf32>
    %cst_7 = arith.constant dense<0.000000e+00> : vector<16xf32>
    %12 = vector.multi_reduction <add>, %11, %cst_7 [1] : vector<16x128xf32> to vector<16xf32>
    %13 = vector.shape_cast %12 : vector<16xf32> to vector<16x1xf32>
    %cst_8 = arith.constant 7.812500e-03 : f32
    %14 = vector.broadcast %cst_8 : f32 to vector<16x1xf32>
    %15 = arith.mulf %13, %14 : vector<16x1xf32>
    %16 = arith.mulf %11, %11 : vector<16x128xf32>
    %cst_9 = arith.constant dense<0.000000e+00> : vector<16xf32>
    %17 = vector.multi_reduction <add>, %16, %cst_9 [1] : vector<16x128xf32> to vector<16xf32>
    %18 = vector.shape_cast %17 : vector<16xf32> to vector<16x1xf32>
    %cst_10 = arith.constant 7.812500e-03 : f32
    %19 = vector.broadcast %cst_10 : f32 to vector<16x1xf32>
    %20 = arith.mulf %18, %19 : vector<16x1xf32>
    %21 = arith.mulf %15, %15 : vector<16x1xf32>
    %22 = arith.subf %20, %21 : vector<16x1xf32>
    %cst_11 = arith.constant 0.000000e+00 : f32
    %23 = vector.broadcast %cst_11 : f32 to vector<16x1xf32>
    %24 = arith.maximumf %22, %23 : vector<16x1xf32>
    %cst_12 = arith.constant 9.99999996E-13 : f32
    %25 = vector.broadcast %cst_12 : f32 to vector<16x1xf32>
    %26 = arith.addf %24, %25 : vector<16x1xf32>
    %27 = math.rsqrt %26 : vector<16x1xf32>
    %28 = vector.broadcast %15 : vector<16x1xf32> to vector<16x128xf32>
    %29 = arith.subf %11, %28 : vector<16x128xf32>
    %30 = vector.broadcast %27 : vector<16x1xf32> to vector<16x128xf32>
    %31 = arith.mulf %29, %30 : vector<16x128xf32>
    %32 = vector.broadcast %6 : vector<1x128xf32> to vector<16x128xf32>
    %33 = arith.mulf %31, %32 : vector<16x128xf32>
    %34 = vector.broadcast %7 : vector<1x128xf32> to vector<16x128xf32>
    %35 = arith.addf %33, %34 : vector<16x128xf32>
    %c0_13 = arith.constant 0 : index
    %c0_14 = arith.constant 0 : index
    %36 = vector.load %arg5[%c0_13, %c0_14] : memref<16x128xf32, #tpu.memory_space<vmem>>, vector<16x128xf32>
    tpu.vector_store %arg5[%c0_13, %c0_14], %35 {strides = array<i32>} : memref<16x128xf32, #tpu.memory_space<vmem>>, vector<16x128xf32>,
    return
  }
  func.func @transform_0(%arg0: i32) -> (i32, i32) {
    %c0_i32 = arith.constant 0 : i32
    %c0_i32_0 = arith.constant 0 : i32
    return %arg0, %c0_i32 : i32, i32
  }
  func.func @transform_1(%arg0: i32) -> (i32, i32) {
    %c0_i32 = arith.constant 0 : i32
    %c0_i32_0 = arith.constant 0 : i32
    return %arg0, %c0_i32 : i32, i32
  }
  func.func @transform_2(%arg0: i32) -> (i32, i32) {
    %c0_i32 = arith.constant 0 : i32
    %c0_i32_0 = arith.constant 0 : i32
    %c0_i32_1 = arith.constant 0 : i32
    return %c0_i32, %c0_i32_0 : i32, i32
  }
  func.func @transform_3(%arg0: i32) -> (i32, i32) {
    %c0_i32 = arith.constant 0 : i32
    %c0_i32_0 = arith.constant 0 : i32
    %c0_i32_1 = arith.constant 0 : i32
    return %c0_i32, %c0_i32_0 : i32, i32
  }
  func.func @transform_4(%arg0: i32) -> (i32, i32) {
    %c0_i32 = arith.constant 0 : i32
    %c0_i32_0 = arith.constant 0 : i32
    return %arg0, %c0_i32 : i32, i32
  }
}

module attributes {stable_mosaic.version = 11 : i64} {
  func.func @_bert_output_kernel(%arg0: i32, %arg1: memref<16x512xf32, #tpu.memory_space<vmem>>, %arg2: memref<16x128xf32, #tpu.memory_space<vmem>>, %arg3: memref<512x128xbf16, #tpu.memory_space<vmem>>, %arg4: memref<3x128xf32, #tpu.memory_space<vmem>>, %arg5: memref<16x128xf32, #tpu.memory_space<vmem>>) attributes {dimension_semantics = [#tpu.dimension_semantics<parallel>], iteration_bounds = array<i64: 2>, scalar_prefetch = 0 : i64, scratch_operands = 0 : i64, tpu.core_type = #tpu.core_type<tc>, window_params = [{transform_indices = @transform_0, window_bounds = array<i64: 16, 512>}, {transform_indices = @transform_1, window_bounds = array<i64: 16, 128>}, {pipeline_mode = #tpu.pipeline_mode<synchronous>, transform_indices = @transform_2, window_bounds = array<i64: 512, 128>}, {pipeline_mode = #tpu.pipeline_mode<synchronous>, transform_indices = @transform_3, window_bounds = array<i64: 3, 128>}, {transform_indices = @transform_4, window_bounds = array<i64: 16, 128>}]} {
    %c0 = arith.constant 0 : index
    %c0_0 = arith.constant 0 : index
    %0 = vector.load %arg1[%c0, %c0_0] : memref<16x512xf32, #tpu.memory_space<vmem>>, vector<16x512xf32>
    %1 = arith.truncf %0 : vector<16x512xf32> to vector<16x512xbf16>
    %c0_1 = arith.constant 0 : index
    %c0_2 = arith.constant 0 : index
    %2 = vector.load %arg3[%c0_1, %c0_2] : memref<512x128xbf16, #tpu.memory_space<vmem>>, vector<512x128xbf16>
    %cst = arith.constant dense<0.000000e+00> : vector<16x128xf32>
    %3 = tpu.matmul %1, %2, %cst {dimension_numbers = #tpu.dot_dimension_numbers<[1], [0], [0], [1], [0, 0, 1, 1], [], []>} : vector<16x512xbf16>, vector<512x128xbf16>, vector<16x128xf32> -> vector<16x128xf32>
    %c0_3 = arith.constant 0 : index
    %c0_4 = arith.constant 0 : index
    %4 = vector.load %arg4[%c0_3, %c0_4] : memref<3x128xf32, #tpu.memory_space<vmem>>, vector<3x128xf32>
    %5 = vector.extract_strided_slice %4 {offsets = [0, 0], sizes = [1, 128], strides = [1, 1]} : vector<3x128xf32> to vector<1x128xf32>
    %6 = vector.extract_strided_slice %4 {offsets = [1, 0], sizes = [1, 128], strides = [1, 1]} : vector<3x128xf32> to vector<1x128xf32>
    %7 = vector.extract_strided_slice %4 {offsets = [2, 0], sizes = [1, 128], strides = [1, 1]} : vector<3x128xf32> to vector<1x128xf32>
    %8 = vector.broadcast %5 : vector<1x128xf32> to vector<16x128xf32>
    %9 = arith.addf %3, %8 : vector<16x128xf32>
    %c0_5 = arith.constant 0 : index
    %c0_6 = arith.constant 0 : index
    %10 = vector.load %arg2[%c0_5, %c0_6] : memref<16x128xf32, #tpu.memory_space<vmem>>, vector<16x128xf32>
    %11 = arith.addf %9, %10 : vector<16x128xf32>
    %cst_7 = arith.constant dense<0.000000e+00> : vector<16xf32>
    %12 = vector.multi_reduction <add>, %11, %cst_7 [1] : vector<16x128xf32> to vector<16xf32>
    %13 = vector.shape_cast %12 : vector<16xf32> to vector<16x1xf32>
    %cst_8 = arith.constant 7.812500e-03 : f32
    %14 = vector.broadcast %cst_8 : f32 to vector<16x1xf32>
    %15 = arith.mulf %13, %14 : vector<16x1xf32>
    %16 = arith.mulf %11, %11 : vector<16x128xf32>
    %cst_9 = arith.constant dense<0.000000e+00> : vector<16xf32>
    %17 = vector.multi_reduction <add>, %16, %cst_9 [1] : vector<16x128xf32> to vector<16xf32>
    %18 = vector.shape_cast %17 : vector<16xf32> to vector<16x1xf32>
    %cst_10 = arith.constant 7.812500e-03 : f32
    %19 = vector.broadcast %cst_10 : f32 to vector<16x1xf32>
    %20 = arith.mulf %18, %19 : vector<16x1xf32>
    %21 = arith.mulf %15, %15 : vector<16x1xf32>
    %22 = arith.subf %20, %21 : vector<16x1xf32>
    %cst_11 = arith.constant 0.000000e+00 : f32
    %23 = vector.broadcast %cst_11 : f32 to vector<16x1xf32>
    %24 = arith.maximumf %22, %23 : vector<16x1xf32>
    %cst_12 = arith.constant 9.99999996E-13 : f32
    %25 = vector.broadcast %cst_12 : f32 to vector<16x1xf32>
    %26 = arith.addf %24, %25 : vector<16x1xf32>
    %27 = math.rsqrt %26 : vector<16x1xf32>
    %28 = vector.broadcast %15 : vector<16x1xf32> to vector<16x128xf32>
    %29 = arith.subf %11, %28 : vector<16x128xf32>
    %30 = vector.broadcast %27 : vector<16x1xf32> to vector<16x128xf32>
    %31 = arith.mulf %29, %30 : vector<16x128xf32>
    %32 = vector.broadcast %6 : vector<1x128xf32> to vector<16x128xf32>
    %33 = arith.mulf %31, %32 : vector<16x128xf32>
    %34 = vector.broadcast %7 : vector<1x128xf32> to vector<16x128xf32>
    %35 = arith.addf %33, %34 : vector<16x128xf32>
    %c0_13 = arith.constant 0 : index
    %c0_14 = arith.constant 0 : index
    %36 = vector.load %arg5[%c0_13, %c0_14] : memref<16x128xf32, #tpu.memory_space<vmem>>, vector<16x128xf32>
    tpu.vector_store %arg5[%c0_13, %c0_14], %35 {strides = array<i32>} : memref<16x128xf32, #tpu.memory_space<vmem>>, vector<16x128xf32>,
    return
  }
  func.func @transform_0(%arg0: i32) -> (i32, i32) {
    %c0_i32 = arith.constant 0 : i32
    %c0_i32_0 = arith.constant 0 : i32
    return %arg0, %c0_i32 : i32, i32
  }
  func.func @transform_1(%arg0: i32) -> (i32, i32) {
    %c0_i32 = arith.constant 0 : i32
    %c0_i32_0 = arith.constant 0 : i32
    return %arg0, %c0_i32 : i32, i32
  }
  func.func @transform_2(%arg0: i32) -> (i32, i32) {
    %c0_i32 = arith.constant 0 : i32
    %c0_i32_0 = arith.constant 0 : i32
    %c0_i32_1 = arith.constant 0 : i32
    return %c0_i32, %c0_i32_0 : i32, i32
  }
  func.func @transform_3(%arg0: i32) -> (i32, i32) {
    %c0_i32 = arith.constant 0 : i32
    %c0_i32_0 = arith.constant 0 : i32
    %c0_i32_1 = arith.constant 0 : i32
    return %c0_i32, %c0_i32_0 : i32, i32
  }
  func.func @transform_4(%arg0: i32) -> (i32, i32) {
    %c0_i32 = arith.constant 0 : i32
    %c0_i32_0 = arith.constant 0 : i32
    return %arg0, %c0_i32 : i32, i32
  }
}

</mosaic_0001>

<llo_original>
// kernel: tpu_custom_call.1
$region0: #{tpu_custom_call.1}
  #allocation0 [shape = 'u32[]', space=smem, size = 0x4, offset = 0x4, fixed_abs, tag = 'smem constant byte address 0x4 - core index']
  #allocation1 [shape = 'u32[144,128]{1,0:T(1,128)}', space=vmem, size = 0x12000, scoped, tag = 'internal scratch']
  %s0 = inlined_call_operand.hbm [shape: f32[32,512], index: 0, kind: input, shape index: {}]
  %s1 = inlined_call_operand.hbm [shape: f32[32,128], index: 1, kind: input, shape index: {}]
  %s2 = inlined_call_operand.hbm [shape: bf16[512,128], index: 2, kind: input, shape index: {}]
  %s3 = inlined_call_operand.vmem [shape: f32[3,128], index: 3, kind: input, shape index: {}]
  %s4 = inlined_call_operand.hbm [shape: f32[32,128], index: 4, kind: output, shape index: {}]
  %s5 = sld [smem:[#allocation0]]
  $region61: #{tpu_custom_call.1} parent=0
    _
  %s7 = ssub.s32 1, %s5
  %s8 = scalar_select 0, %s7, %s5
  $region1: #{tpu_custom_call.1} parent=0
    #allocation2 [shape = 'u8[65536]{0}', space=vmem, size = 0x10000, scoped, tag = 'input window, operand 0']
    #allocation3 [shape = 's32[2]{0}', space=sflag, size = 0x8, scoped, tag = 'scoped memory for tpu_custom_call.1']
    #allocation4 [shape = 's32[2]{0}', space=sflag, size = 0x8, scoped, tag = 'scoped memory for tpu_custom_call.1']
    #allocation5 [shape = 'u8[16384]{0}', space=vmem, size = 0x4000, scoped, tag = 'input window, operand 1']
    #allocation6 [shape = 's32[2]{0}', space=sflag, size = 0x8, scoped, tag = 'scoped memory for tpu_custom_call.1']
    #allocation7 [shape = 'u8[131072]{0}', space=vmem, size = 0x20000, scoped, tag = 'input window, operand 2, single buffered']
    #allocation8 [shape = 'u8[16384]{0}', space=vmem, size = 0x4000, scoped, tag = 'output window, operand 0']
    %9 = vsyncpa [#allocation3], 0
    %s10 = scalar_lea.sflag [#allocation3], 1
    %11 = vsyncpa %s10, 0
    %12 = vsyncpa [#allocation6], 0
    %s13 = scalar_lea.sflag [#allocation6], 1
    %14 = vsyncpa %s13, 0
    %15 = vsyncpa [#allocation4], 0
    %s16 = scalar_lea.sflag [#allocation4], 1
    %17 = vsyncpa %s16, 0
    loop: start=0, step=1, limit=4
    $region2: #{tpu_custom_call.1} parent=1 // loop_pre_header
      _
    $region3: #{tpu_custom_call.1} parent=1 // loop_header
      %s19 = sphi 0, %s23
      %p20 = scmp.ge.s32.totalorder %s19, 4
      %s29 = sphi 0, %s31
      %s32 = sphi 0, %s29
      %s33 = sphi 0, %s32
      %s49 = sphi 0, %s33
      %s55 = sphi 0, %s57
      %s58 = sphi 0, %s55
      %s59 = sphi 0, %s58
      %s75 = sphi 0, %s59
      %s79 = sphi 0, %s79
      %s81 = sphi 0, %s79
      %s82 = sphi 0, %s81
      %s96 = sphi 0, %s82
      %s100 = sphi 0, %s100
      %s102 = sphi 0, %s100
      %s103 = sphi 0, %s102
      %s117 = sphi 0, %s103
      %s123 = sphi 0, %s125
      %s126 = sphi 0, %s123
      %s127 = sphi 0, %s126
      %s143 = sphi 0, %s127
    $region4: #{tpu_custom_call.1} parent=1 // loop_header_branch
      %22 = sbr.rel (%p20) target = $region8
    $region5: #{tpu_custom_call.1} parent=1 // loop_body
      %s24 = ssub.s32 %s19, 1
      %s25 = ssub.s32 %s19, 2
      %s26 = sadd.s32 %s19, 1
      %s27 = ssub.s32 %s19, %s26
      %p28 = scmp.eq.s32.totalorder %s27, 0
      %s30 = sadd.s32 %s29, 1
      %s31 = scalar_select %p28, %s29, %s30
      %p34 = pneg %p28
      %p35 = scmp.eq.s32.totalorder %s19, 1
      %p36 = por %p34, %p35
      %p37 = scmp.ne.s32.totalorder %s29, %s32
      %p38 = scmp.eq.s32.totalorder %s19, 0
      %p39 = por %p37, %p38
      %p40 = scmp.ne.s32.totalorder %s29, %s32
      %p41 = scmp.eq.s32.totalorder %s24, 1
      %p42 = por %p40, %p41
      %p43 = scmp.ne.s32.totalorder %s32, %s33
      %p44 = scmp.eq.s32.totalorder %s24, 0
      %p45 = por %p43, %p44
      %p46 = scmp.ne.s32.totalorder %s32, %s33
      %p47 = scmp.eq.s32.totalorder %s25, 1
      %p48 = por %p46, %p47
      %p50 = scmp.ne.s32.totalorder %s33, %s49
      %p51 = scmp.eq.s32.totalorder %s25, 0
      %p52 = por %p50, %p51
      %s53 = ssub.s32 %s19, %s26
      %p54 = scmp.eq.s32.totalorder %s53, 0
      %s56 = sadd.s32 %s55, 1
      %s57 = scalar_select %p54, %s55, %s56
      %p60 = pneg %p54
      %p61 = scmp.eq.s32.totalorder %s19, 1
      %p62 = por %p60, %p61
      %p63 = scmp.ne.s32.totalorder %s55, %s58
      %p64 = scmp.eq.s32.totalorder %s19, 0
      %p65 = por %p63, %p64
      %p66 = scmp.ne.s32.totalorder %s55, %s58
      %p67 = scmp.eq.s32.totalorder %s24, 1
      %p68 = por %p66, %p67
      %p69 = scmp.ne.s32.totalorder %s58, %s59
      %p70 = scmp.eq.s32.totalorder %s24, 0
      %p71 = por %p69, %p70
      %p72 = scmp.ne.s32.totalorder %s58, %s59
      %p73 = scmp.eq.s32.totalorder %s25, 1
      %p74 = por %p72, %p73
      %p76 = scmp.ne.s32.totalorder %s59, %s75
      %p77 = scmp.eq.s32.totalorder %s25, 0
      %p78 = por %p76, %p77
      %s80 = sadd.s32 %s79, 1
      %p83 = scmp.eq.s32.totalorder %s19, 1
      %p84 = scmp.ne.s32.totalorder %s79, %s81
      %p85 = scmp.eq.s32.totalorder %s19, 0
      %p86 = por %p84, %p85
      %p87 = scmp.ne.s32.totalorder %s79, %s81
      %p88 = scmp.eq.s32.totalorder %s24, 1
      %p89 = por %p87, %p88
      %p90 = scmp.ne.s32.totalorder %s81, %s82
      %p91 = scmp.eq.s32.totalorder %s24, 0
      %p92 = por %p90, %p91
      %p93 = scmp.ne.s32.totalorder %s81, %s82
      %p94 = scmp.eq.s32.totalorder %s25, 1
      %p95 = por %p93, %p94
      %p97 = scmp.ne.s32.totalorder %s82, %s96
      %p98 = scmp.eq.s32.totalorder %s25, 0
      %p99 = por %p97, %p98
      %s101 = sadd.s32 %s100, 1
      %p104 = scmp.eq.s32.totalorder %s19, 1
      %p105 = scmp.ne.s32.totalorder %s100, %s102
      %p106 = scmp.eq.s32.totalorder %s19, 0
      %p107 = por %p105, %p106
      %p108 = scmp.ne.s32.totalorder %s100, %s102
      %p109 = scmp.eq.s32.totalorder %s24, 1
      %p110 = por %p108, %p109
      %p111 = scmp.ne.s32.totalorder %s102, %s103
      %p112 = scmp.eq.s32.totalorder %s24, 0
      %p113 = por %p111, %p112
      %p114 = scmp.ne.s32.totalorder %s102, %s103
      %p115 = scmp.eq.s32.totalorder %s25, 1
      %p116 = por %p114, %p115
      %p118 = scmp.ne.s32.totalorder %s103, %s117
      %p119 = scmp.eq.s32.totalorder %s25, 0
      %p120 = por %p118, %p119
      %s121 = ssub.s32 %s19, %s26
      %p122 = scmp.eq.s32.totalorder %s121, 0
      %s124 = sadd.s32 %s123, 1
      %s125 = scalar_select %p122, %s123, %s124
      %p128 = pneg %p122
      %p129 = scmp.eq.s32.totalorder %s19, 1
      %p130 = por %p128, %p129
      %p131 = scmp.ne.s32.totalorder %s123, %s126
      %p132 = scmp.eq.s32.totalorder %s19, 0
      %p133 = por %p131, %p132
      %p134 = scmp.ne.s32.totalorder %s123, %s126
      %p135 = scmp.eq.s32.totalorder %s24, 1
      %p136 = por %p134, %p135
      %p137 = scmp.ne.s32.totalorder %s126, %s127
      %p138 = scmp.eq.s32.totalorder %s24, 0
      %p139 = por %p137, %p138
      %p140 = scmp.ne.s32.totalorder %s126, %s127
      %p141 = scmp.eq.s32.totalorder %s25, 1
      %p142 = por %p140, %p141
      %p144 = scmp.ne.s32.totalorder %s127, %s143
      %p145 = scmp.eq.s32.totalorder %s25, 0
      %p146 = por %p144, %p145
      %p147 = scmp.le.s32.totalorder 1, %s19
      %p148 = scmp.lt.s32.totalorder %s19, 3
      %p149 = pnand %p147, %p148
      %p150 = pneg %p149
      // Predicated region
      $region9: #{tpu_custom_call.1} parent=5 // pred_check
        _
      $region10: #{tpu_custom_call.1} parent=5 // pred_check_branch
        %152 = sbr.rel (%p149) target = $region12
      $region11: #{tpu_custom_call.1} parent=5 // pred_region
        %s153 = ssub.s32 %s19, 1
        // Predicated region
        $region13: #{tpu_custom_call.1} parent=11 // pred_check
          %p154 = pneg %p92
        $region14: #{tpu_custom_call.1} parent=11 // pred_check_branch
          %156 = sbr.rel (%p154) target = $region16
        $region15: #{tpu_custom_call.1} parent=11 // pred_region
          %s158 = ssub.s32 4096, 4096
          %159 = vsyncadd [#allocation6], %s158
          %s160 = sshll.u32 [#allocation7], 4
          %s161 = int_to_ptr.vmem [resolvable:$true] %s160
          %166 = dma.hbm_to_vmem [thread:$0]  %s2, 4096, %s161, [#allocation6], 64, 64, 4
        $region16: #{tpu_custom_call.1} parent=11 // pred_fallthru
          _
        // Predicated region
        $region17: #{tpu_custom_call.1} parent=11 // pred_check
          %p167 = pneg %p113
        $region18: #{tpu_custom_call.1} parent=11 // pred_check_branch
          %169 = sbr.rel (%p167) target = $region20
        $region19: #{tpu_custom_call.1} parent=11 // pred_region
          _
        $region20: #{tpu_custom_call.1} parent=11 // pred_fallthru
          _
      $region12: #{tpu_custom_call.1} parent=5 // pred_fallthru
        _
      %p170 = scmp.lt.s32.totalorder %s19, 2
      // Predicated region
      $region21: #{tpu_custom_call.1} parent=5 // pred_check
        %p171 = pneg %p170
      $region22: #{tpu_custom_call.1} parent=5 // pred_check_branch
        %173 = sbr.rel (%p171) target = $region24
      $region23: #{tpu_custom_call.1} parent=5 // pred_region
        // Predicated region
        $region25: #{tpu_custom_call.1} parent=23 // pred_check
          %p174 = pneg %p39
        $region26: #{tpu_custom_call.1} parent=23 // pred_check_branch
          %176 = sbr.rel (%p174) target = $region28
        $region27: #{tpu_custom_call.1} parent=23 // pred_region
          %s177 = sand.u32 %s29, 1
          %s178 = scalar_lea.sflag [#allocation3], %s177
          %s179 = sand.u32 %s29, 1
          %s180 = smul.addr %s179, 64
          %s181 = scalar_lea.vmem [#allocation2], %s180
          %s182 = smul.u32 2, %s19
          %s184 = ssub.s32 1024, 1024
          %185 = vsyncadd %s178, %s184
          %s186 = smul.addr %s182, 4
          %s187 = smul.addr %s186, 128
          %s188 = scalar_lea.hbm %s0, %s187
          %s189 = sshll.u32 %s181, 4
          %s190 = int_to_ptr.vmem [resolvable:$true] %s189
          %195 = dma.hbm_to_vmem [thread:$0]  %s188, 1024, %s190, %s178, 512, 512, 32
        $region28: #{tpu_custom_call.1} parent=23 // pred_fallthru
          _
        // Predicated region
        $region29: #{tpu_custom_call.1} parent=23 // pred_check
          %p196 = pneg %p65
        $region30: #{tpu_custom_call.1} parent=23 // pred_check_branch
          %198 = sbr.rel (%p196) target = $region32
        $region31: #{tpu_custom_call.1} parent=23 // pred_region
          %s199 = sand.u32 %s19, 1
          %s200 = scalar_lea.sflag [#allocation6], %s199
          %s201 = sand.u32 %s55, 1
          %s202 = smul.addr %s201, 16
          %s203 = scalar_lea.vmem [#allocation5], %s202
          %s204 = smul.u32 2, %s19
          %s206 = ssub.s32 256, 256
          %207 = vsyncadd %s200, %s206
          %s208 = smul.addr %s204, 128
          %s209 = scalar_lea.hbm %s1, %s208
          %s210 = sshll.u32 %s203, 4
          %s211 = int_to_ptr.vmem [resolvable:$true] %s210
          %216 = dma.hbm_to_vmem [thread:$0]  %s209, 256, %s211, %s200, 128, 128, 8
        $region32: #{tpu_custom_call.1} parent=23 // pred_fallthru
          _
      $region24: #{tpu_custom_call.1} parent=5 // pred_fallthru
        _
      %p217 = scmp.le.s32.totalorder 1, %s19
      %p218 = scmp.lt.s32.totalorder %s19, 3
      %p219 = pnand %p217, %p218
      %p220 = pneg %p219
      // Predicated region
      $region33: #{tpu_custom_call.1} parent=5 // pred_check
        _
      $region34: #{tpu_custom_call.1} parent=5 // pred_check_branch
        %222 = sbr.rel (%p219) target = $region36
      $region35: #{tpu_custom_call.1} parent=5 // pred_region
        %s223 = ssub.s32 %s19, 1
        %s224 = sand.u32 %s32, 1
        %s225 = scalar_lea.sflag [#allocation3], %s224
        %s226 = sand.u32 %s32, 1
        %s227 = smul.addr %s226, 64
        %s228 = scalar_lea.vmem [#allocation2], %s227
        // Predicated region
        $region37: #{tpu_custom_call.1} parent=35 // pred_check
          %p229 = pneg %p45
        $region38: #{tpu_custom_call.1} parent=35 // pred_check_branch
          %231 = sbr.rel (%p229) target = $region40
        $region39: #{tpu_custom_call.1} parent=35 // pred_region
          %232 = dma.done %s225, 1024
        $region40: #{tpu_custom_call.1} parent=35 // pred_fallthru
          _
        %s233 = sand.u32 %s24, 1
        %s234 = scalar_lea.sflag [#allocation6], %s233
        %s235 = sand.u32 %s58, 1
        %s236 = smul.addr %s235, 16
        %s237 = scalar_lea.vmem [#allocation5], %s236
        // Predicated region
        $region41: #{tpu_custom_call.1} parent=35 // pred_check
          %p238 = pneg %p71
        $region42: #{tpu_custom_call.1} parent=35 // pred_check_branch
          %240 = sbr.rel (%p238) target = $region44
        $region43: #{tpu_custom_call.1} parent=35 // pred_region
          %241 = dma.done %s234, 256
        $region44: #{tpu_custom_call.1} parent=35 // pred_fallthru
          _
        // Predicated region
        $region45: #{tpu_custom_call.1} parent=35 // pred_check
          %p242 = pneg %p92
        $region46: #{tpu_custom_call.1} parent=35 // pred_check_branch
          %244 = sbr.rel (%p242) target = $region48
        $region47: #{tpu_custom_call.1} parent=35 // pred_region
          %245 = dma.done [#allocation6], 4096
        $region48: #{tpu_custom_call.1} parent=35 // pred_fallthru
          _
        %s246 = sand.u32 %s32, 1
        %s247 = scalar_lea.sflag [#allocation3], %s246
        %s248 = sand.u32 %s32, 1
        %s249 = smul.addr %s248, 64
        %s250 = scalar_lea.vmem [#allocation2], %s249
        %p251 = pneg %p45
        %p252 = pneg %p42
        %s253 = sand.u32 %s24, 1
        %s254 = scalar_lea.sflag [#allocation6], %s253
        %s255 = sand.u32 %s58, 1
        %s256 = smul.addr %s255, 16
        %s257 = scalar_lea.vmem [#allocation5], %s256
        %p258 = pneg %p71
        %p259 = pneg %p68
        %p260 = pneg %p92
        %p261 = pneg %p89
        %p262 = pneg %p113
        %p263 = pneg %p110
        %p264 = pneg %p139
        %p265 = pneg %p136
        %s266 = sand.u32 %s126, 1
        %s267 = scalar_lea.sflag [#allocation4], %s266
        %s268 = sand.u32 %s126, 1
        %s269 = smul.addr %s268, 16
        %s270 = scalar_lea.vmem [#allocation8], %s269
        %s271 = smul.u32 2, %s24
        %s272 = smul.u32 2, %s24
        %s273 = smul.u32 2, %s24
        %v275 = vld [vmem:[%s228] sm:$0xff]
        %v276 = vld [vmem:[%s228 + $0x8] sm:$0xff]
        %v277 = vld [vmem:[%s228 + $0x10] sm:$0xff]
        %v278 = vld [vmem:[%s228 + $0x18] sm:$0xff]
        %v279 = vld [vmem:[%s228 + $0x20] sm:$0xff]
        %v280 = vld [vmem:[%s228 + $0x28] sm:$0xff]
        %v281 = vld [vmem:[%s228 + $0x30] sm:$0xff]
        %v282 = vld [vmem:[%s228 + $0x38] sm:$0xff]
        %v283 = vpack.c.bf16 %v279, %v275
        %v284 = vpack.c.bf16 %v280, %v276
        %v285 = vpack.c.bf16 %v281, %v277
        %v286 = vpack.c.bf16 %v282, %v278
        %v287 = vld [vmem:[#allocation7] sm:$0xf]
        %v288 = vld [vmem:[#allocation7 + $0x4] sm:$0xf]
        %v289 = vld [vmem:[#allocation7 + $0x8] sm:$0xf]
        %v290 = vld [vmem:[#allocation7 + $0xc] sm:$0xf]
        %v291 = vld [vmem:[#allocation7 + $0x10] sm:$0xf]
        %v292 = vld [vmem:[#allocation7 + $0x14] sm:$0xf]
        %v293 = vld [vmem:[#allocation7 + $0x18] sm:$0xf]
        %v294 = vld [vmem:[#allocation7 + $0x1c] sm:$0xf]
        %v295 = vld [vmem:[#allocation7 + $0x20] sm:$0xf]
        %v296 = vld [vmem:[#allocation7 + $0x24] sm:$0xf]
        %v297 = vld [vmem:[#allocation7 + $0x28] sm:$0xf]
        %v298 = vld [vmem:[#allocation7 + $0x2c] sm:$0xf]
        %v299 = vld [vmem:[#allocation7 + $0x30] sm:$0xf]
        %v300 = vld [vmem:[#allocation7 + $0x34] sm:$0xf]
        %v301 = vld [vmem:[#allocation7 + $0x38] sm:$0xf]
        %v302 = vld [vmem:[#allocation7 + $0x3c] sm:$0xf]
        %v303 = vld [vmem:[#allocation7 + $0x40] sm:$0xf]
        %v304 = vld [vmem:[#allocation7 + $0x44] sm:$0xf]
        %v305 = vld [vmem:[#allocation7 + $0x48] sm:$0xf]
        %v306 = vld [vmem:[#allocation7 + $0x4c] sm:$0xf]
        %v307 = vld [vmem:[#allocation7 + $0x50] sm:$0xf]
        %v308 = vld [vmem:[#allocation7 + $0x54] sm:$0xf]
        %v309 = vld [vmem:[#allocation7 + $0x58] sm:$0xf]
        %v310 = vld [vmem:[#allocation7 + $0x5c] sm:$0xf]
        %v311 = vld [vmem:[#allocation7 + $0x60] sm:$0xf]
        %v312 = vld [vmem:[#allocation7 + $0x64] sm:$0xf]
        %v313 = vld [vmem:[#allocation7 + $0x68] sm:$0xf]
        %v314 = vld [vmem:[#allocation7 + $0x6c] sm:$0xf]
        %v315 = vld [vmem:[#allocation7 + $0x70] sm:$0xf]
        %v316 = vld [vmem:[#allocation7 + $0x74] sm:$0xf]
        %v317 = vld [vmem:[#allocation7 + $0x78] sm:$0xf]
        %v318 = vld [vmem:[#allocation7 + $0x7c] sm:$0xf]
        %v319 = vld [vmem:[#allocation7 + $0x80] sm:$0xf]
        %v320 = vld [vmem:[#allocation7 + $0x84] sm:$0xf]
        %v321 = vld [vmem:[#allocation7 + $0x88] sm:$0xf]
        %v322 = vld [vmem:[#allocation7 + $0x8c] sm:$0xf]
        %v323 = vld [vmem:[#allocation7 + $0x90] sm:$0xf]
        %v324 = vld [vmem:[#allocation7 + $0x94] sm:$0xf]
        %v325 = vld [vmem:[#allocation7 + $0x98] sm:$0xf]
        %v326 = vld [vmem:[#allocation7 + $0x9c] sm:$0xf]
        %v327 = vld [vmem:[#allocation7 + $0xa0] sm:$0xf]
        %v328 = vld [vmem:[#allocation7 + $0xa4] sm:$0xf]
        %v329 = vld [vmem:[#allocation7 + $0xa8] sm:$0xf]
        %v330 = vld [vmem:[#allocation7 + $0xac] sm:$0xf]
        %v331 = vld [vmem:[#allocation7 + $0xb0] sm:$0xf]
        %v332 = vld [vmem:[#allocation7 + $0xb4] sm:$0xf]
        %v333 = vld [vmem:[#allocation7 + $0xb8] sm:$0xf]
        %v334 = vld [vmem:[#allocation7 + $0xbc] sm:$0xf]
        %v335 = vld [vmem:[#allocation7 + $0xc0] sm:$0xf]
        %v336 = vld [vmem:[#allocation7 + $0xc4] sm:$0xf]
        %v337 = vld [vmem:[#allocation7 + $0xc8] sm:$0xf]
        %v338 = vld [vmem:[#allocation7 + $0xcc] sm:$0xf]
        %v339 = vld [vmem:[#allocation7 + $0xd0] sm:$0xf]
        %v340 = vld [vmem:[#allocation7 + $0xd4] sm:$0xf]
        %v341 = vld [vmem:[#allocation7 + $0xd8] sm:$0xf]
        %v342 = vld [vmem:[#allocation7 + $0xdc] sm:$0xf]
        %v343 = vld [vmem:[#allocation7 + $0xe0] sm:$0xf]
        %v344 = vld [vmem:[#allocation7 + $0xe4] sm:$0xf]
        %v345 = vld [vmem:[#allocation7 + $0xe8] sm:$0xf]
        %v346 = vld [vmem:[#allocation7 + $0xec] sm:$0xf]
        %v347 = vld [vmem:[#allocation7 + $0xf0] sm:$0xf]
        %v348 = vld [vmem:[#allocation7 + $0xf4] sm:$0xf]
        %v349 = vld [vmem:[#allocation7 + $0xf8] sm:$0xf]
        %v350 = vld [vmem:[#allocation7 + $0xfc] sm:$0xf]
        %v351 = vld [vmem:[%s3] sm:$0x7]
        %v352 = vlaneseq
        %v353 = vshrl.u32 %v352, 7
        %v354 = vsub.s32 0, %v353
        %v355 = vrot.slane %v351, %v354
        %v420 = vunpack.c.l.b16 %v287
        %v421 = vunpack.c.l.b16 %v288
        %v422 = vunpack.c.l.b16 %v289
        %v423 = vunpack.c.l.b16 %v290
        %v424 = vunpack.c.l.b16 %v291
        %v425 = vunpack.c.l.b16 %v292
        %v426 = vunpack.c.l.b16 %v293
        %v427 = vunpack.c.l.b16 %v294
        %v428 = vunpack.c.l.b16 %v295
        %v429 = vunpack.c.l.b16 %v296
        %v430 = vunpack.c.l.b16 %v297
        %v431 = vunpack.c.l.b16 %v298
        %v432 = vunpack.c.l.b16 %v299
        %v433 = vunpack.c.l.b16 %v300
        %v434 = vunpack.c.l.b16 %v301
        %v435 = vunpack.c.l.b16 %v302
        %v436 = vunpack.c.l.b16 %v303
        %v437 = vunpack.c.l.b16 %v304
        %v438 = vunpack.c.l.b16 %v305
        %v439 = vunpack.c.l.b16 %v306
        %v440 = vunpack.c.l.b16 %v307
        %v441 = vunpack.c.l.b16 %v308
        %v442 = vunpack.c.l.b16 %v309
        %v443 = vunpack.c.l.b16 %v310
        %v444 = vunpack.c.l.b16 %v311
        %v445 = vunpack.c.l.b16 %v312
        %v446 = vunpack.c.l.b16 %v313
        %v447 = vunpack.c.l.b16 %v314
        %v448 = vunpack.c.l.b16 %v315
        %v449 = vunpack.c.l.b16 %v316
        %v450 = vunpack.c.l.b16 %v317
        %v451 = vunpack.c.l.b16 %v318
        %v452 = vunpack.c.l.b16 %v319
        %v453 = vunpack.c.l.b16 %v320
        %v454 = vunpack.c.l.b16 %v321
        %v455 = vunpack.c.l.b16 %v322
        %v456 = vunpack.c.l.b16 %v323
        %v457 = vunpack.c.l.b16 %v324
        %v458 = vunpack.c.l.b16 %v325
        %v459 = vunpack.c.l.b16 %v326
        %v460 = vunpack.c.l.b16 %v327
        %v461 = vunpack.c.l.b16 %v328
        %v462 = vunpack.c.l.b16 %v329
        %v463 = vunpack.c.l.b16 %v330
        %v464 = vunpack.c.l.b16 %v331
        %v465 = vunpack.c.l.b16 %v332
        %v466 = vunpack.c.l.b16 %v333
        %v467 = vunpack.c.l.b16 %v334
        %v468 = vunpack.c.l.b16 %v335
        %v469 = vunpack.c.l.b16 %v336
        %v470 = vunpack.c.l.b16 %v337
        %v471 = vunpack.c.l.b16 %v338
        %v472 = vunpack.c.l.b16 %v339
        %v473 = vunpack.c.l.b16 %v340
        %v474 = vunpack.c.l.b16 %v341
        %v475 = vunpack.c.l.b16 %v342
        %v476 = vunpack.c.l.b16 %v343
        %v477 = vunpack.c.l.b16 %v344
        %v478 = vunpack.c.l.b16 %v345
        %v479 = vunpack.c.l.b16 %v346
        %v480 = vunpack.c.l.b16 %v347
        %v481 = vunpack.c.l.b16 %v348
        %v482 = vunpack.c.l.b16 %v349
        %v483 = vunpack.c.l.b16 %v350
        %v484 = vpack.c.b16 %v421, %v420
        %v485 = vpack.c.b16 %v423, %v422
        %v486 = vpack.c.b16 %v425, %v424
        %v487 = vpack.c.b16 %v427, %v426
        %v488 = vpack.c.b16 %v429, %v428
        %v489 = vpack.c.b16 %v431, %v430
        %v490 = vpack.c.b16 %v433, %v432
        %v491 = vpack.c.b16 %v435, %v434
        %v492 = vpack.c.b16 %v437, %v436
        %v493 = vpack.c.b16 %v439, %v438
        %v494 = vpack.c.b16 %v441, %v440
        %v495 = vpack.c.b16 %v443, %v442
        %v496 = vpack.c.b16 %v445, %v444
        %v497 = vpack.c.b16 %v447, %v446
        %v498 = vpack.c.b16 %v449, %v448
        %v499 = vpack.c.b16 %v451, %v450
        %v500 = vpack.c.b16 %v453, %v452
        %v501 = vpack.c.b16 %v455, %v454
        %v502 = vpack.c.b16 %v457, %v456
        %v503 = vpack.c.b16 %v459, %v458
        %v504 = vpack.c.b16 %v461, %v460
        %v505 = vpack.c.b16 %v463, %v462
        %v506 = vpack.c.b16 %v465, %v464
        %v507 = vpack.c.b16 %v467, %v466
        %v508 = vpack.c.b16 %v469, %v468
        %v509 = vpack.c.b16 %v471, %v470
        %v510 = vpack.c.b16 %v473, %v472
        %v511 = vpack.c.b16 %v475, %v474
        %v512 = vpack.c.b16 %v477, %v476
        %v513 = vpack.c.b16 %v479, %v478
        %v514 = vpack.c.b16 %v481, %v480
        %v515 = vpack.c.b16 %v483, %v482
        %548 = vmatprep.subr.bf16.mxu0 0
        %549 = vmatpush1.bf16.msra.mxu0 %v484
        %550 = vmatprep.subr.bf16.mxu0 0
        %551 = vmatpush1.bf16.msra.mxu0 %v485
        %552 = vmatprep.subr.bf16.mxu0 0
        %553 = vmatpush1.bf16.msra.mxu0 %v486
        %554 = vmatprep.subr.bf16.mxu0 0
        %555 = vmatpush1.bf16.msra.mxu0 %v487
        %556 = vmatprep.subr.bf16.mxu0 0
        %557 = vmatpush1.bf16.msra.mxu0 %v488
        %558 = vmatprep.subr.bf16.mxu0 0
        %559 = vmatpush1.bf16.msra.mxu0 %v489
        %560 = vmatprep.subr.bf16.mxu0 0
        %561 = vmatpush1.bf16.msra.mxu0 %v490
        %562 = vmatprep.subr.bf16.mxu0 0
        %563 = vmatpush1.bf16.msra.mxu0 %v491
        %564 = vmatprep.subr.bf16.mxu0 0
        %565 = vmatpush1.bf16.msra.mxu0 %v492
        %566 = vmatprep.subr.bf16.mxu0 0
        %567 = vmatpush1.bf16.msra.mxu0 %v493
        %568 = vmatprep.subr.bf16.mxu0 0
        %569 = vmatpush1.bf16.msra.mxu0 %v494
        %570 = vmatprep.subr.bf16.mxu0 0
        %571 = vmatpush1.bf16.msra.mxu0 %v495
        %572 = vmatprep.subr.bf16.mxu0 0
        %573 = vmatpush1.bf16.msra.mxu0 %v496
        %574 = vmatprep.subr.bf16.mxu0 0
        %575 = vmatpush1.bf16.msra.mxu0 %v497
        %576 = vmatprep.subr.bf16.mxu0 0
        %577 = vmatpush1.bf16.msra.mxu0 %v498
        %578 = vmatprep.subr.bf16.mxu0 0
        %579 = vmatpush1.bf16.msra.mxu0 %v499
        %580 = vmatprep.mubr.bf16.mxu0 %v284
        %581 = vmatmul.mubr.bf16.gmra.mrb[0].mxu0 %v283
        %v582 = vpop.f32.mrb[0].mxu0
        %v583 = vadd.f32 %v355, %v582
        %v584 = vpop.f32.mrb[0].mxu0
        %v585 = vpop.f32.mrb[0].mxu0
        %v586 = vadd.f32 %v355, %v585
        %v587 = vpop.f32.mrb[0].mxu0
        %588 = vdwg.mxu0
        %589 = vmatprep.subr.bf16.mxu0 0
        %590 = vmatpush1.bf16.msra.mxu0 %v500
        %591 = vmatprep.subr.bf16.mxu0 0
        %592 = vmatpush1.bf16.msra.mxu0 %v501
        %593 = vmatprep.subr.bf16.mxu0 0
        %594 = vmatpush1.bf16.msra.mxu0 %v502
        %595 = vmatprep.subr.bf16.mxu0 0
        %596 = vmatpush1.bf16.msra.mxu0 %v503
        %597 = vmatprep.subr.bf16.mxu0 0
        %598 = vmatpush1.bf16.msra.mxu0 %v504
        %599 = vmatprep.subr.bf16.mxu0 0
        %600 = vmatpush1.bf16.msra.mxu0 %v505
        %601 = vmatprep.subr.bf16.mxu0 0
        %602 = vmatpush1.bf16.msra.mxu0 %v506
        %603 = vmatprep.subr.bf16.mxu0 0
        %604 = vmatpush1.bf16.msra.mxu0 %v507
        %605 = vmatprep.subr.bf16.mxu0 0
        %606 = vmatpush1.bf16.msra.mxu0 %v508
        %607 = vmatprep.subr.bf16.mxu0 0
        %608 = vmatpush1.bf16.msra.mxu0 %v509
        %609 = vmatprep.subr.bf16.mxu0 0
        %610 = vmatpush1.bf16.msra.mxu0 %v510
        %611 = vmatprep.subr.bf16.mxu0 0
        %612 = vmatpush1.bf16.msra.mxu0 %v511
        %613 = vmatprep.subr.bf16.mxu0 0
        %614 = vmatpush1.bf16.msra.mxu0 %v512
        %615 = vmatprep.subr.bf16.mxu0 0
        %616 = vmatpush1.bf16.msra.mxu0 %v513
        %617 = vmatprep.subr.bf16.mxu0 0
        %618 = vmatpush1.bf16.msra.mxu0 %v514
        %619 = vmatprep.subr.bf16.mxu0 0
        %620 = vmatpush1.bf16.msra.mxu0 %v515
        %621 = vmatprep.mubr.bf16.mxu0 %v286
        %622 = vmatmul.mubr.bf16.gmra.mrb[0].mxu0 %v285
        %v623 = vpop.f32.mrb[0].mxu0
        %v624 = vadd.f32 %v583, %v623
        %v625 = vpop.f32.mrb[0].mxu0
        %v626 = vpop.f32.mrb[0].mxu0
        %v627 = vadd.f32 %v586, %v626
        %v628 = vpop.f32.mrb[0].mxu0
        %629 = vdwg.mxu0
        %v630 = vld [vmem:[%s237] sm:$0xff]
        %v631 = vld [vmem:[%s237 + $0x8] sm:$0xff]
        %v632 = vadd.f32 %v624, %v630
        %v633 = vadd.f32 %v627, %v631
        %634 = vadd.xlane.f32.xlu0 %v632
        %v635 = vpop.xlane.xlu0 %634
        %636 = vadd.xlane.f32.xlu0 %v633
        %v637 = vpop.xlane.xlu0 %636
        %v638 = vmul.f32 %v635, 0.0078125
        %v639 = vmul.f32 %v637, 0.0078125
        %v640 = vmul.f32 %v632, %v632
        %v641 = vmul.f32 %v633, %v633
        %642 = vadd.xlane.f32.xlu0 %v640
        %v643 = vpop.xlane.xlu0 %642
        %644 = vadd.xlane.f32.xlu0 %v641
        %v645 = vpop.xlane.xlu0 %644
        %v646 = vmul.f32 %v643, 0.0078125
        %v647 = vmul.f32 %v645, 0.0078125
        %v648 = vmul.f32 %v638, %v638
        %v649 = vmul.f32 %v639, %v639
        %v650 = vsub.f32 %v646, %v648
        %v651 = vsub.f32 %v647, %v649
        %v652 = vmax.f32 %v650, 0.0
        %v653 = vmax.f32 %v651, 0.0
        %v654 = vadd.f32 %v652, 1e-12
        %v655 = vadd.f32 %v653, 1e-12
        %v656 = vrsqrt.pop %v654
        %v657 = vrsqrt.pop %v655
        %v658 = vsub.f32 %v632, %v638
        %v659 = vsub.f32 %v633, %v639
        %v660 = vmul.f32 %v658, %v656
        %v661 = vmul.f32 %v659, %v657
        %v662 = vlaneseq
        %v663 = vshrl.u32 %v662, 7
        %v664 = vsub.s32 1, %v663
        %v665 = vrot.slane %v351, %v664
        %v666 = vmul.f32 %v660, %v665
        %v667 = vmul.f32 %v661, %v665
        %v668 = vlaneseq
        %v669 = vshrl.u32 %v668, 7
        %v670 = vsub.s32 2, %v669
        %v671 = vrot.slane %v351, %v670
        %v672 = vadd.f32 %v666, %v671
        %v673 = vadd.f32 %v667, %v671
        %674 = vst [vmem:[%s270] sm:$0xff] %v672
        %675 = vst [vmem:[%s270 + $0x8] sm:$0xff] %v673
        %s676 = sand.u32 %s126, 1
        %s677 = scalar_lea.sflag [#allocation4], %s676
        %s678 = sand.u32 %s126, 1
        %s679 = smul.addr %s678, 16
        %s680 = scalar_lea.vmem [#allocation8], %s679
        // Predicated region
        $region49: #{tpu_custom_call.1} parent=35 // pred_check
          %p681 = pneg %p136
        $region50: #{tpu_custom_call.1} parent=35 // pred_check_branch
          %683 = sbr.rel (%p681) target = $region52
        $region51: #{tpu_custom_call.1} parent=35 // pred_region
          %s684 = smul.u32 2, %s24
          %s686 = ssub.s32 256, 256
          %687 = vsyncadd %s677, %s686
          %s688 = smul.addr %s684, 128
          %s689 = scalar_lea.hbm %s4, %s688
          %s690 = sshll.u32 %s680, 4
          %s691 = int_to_ptr.vmem [resolvable:$true] %s690
          %696 = dma.vmem_to_hbm [thread:$0]  %s691, 256, %s689, %s677, 128, 128, 8
        $region52: #{tpu_custom_call.1} parent=35 // pred_fallthru
          _
      $region36: #{tpu_custom_call.1} parent=5 // pred_fallthru
        _
      %p697 = scmp.le.s32.totalorder 2, %s19
      // Predicated region
      $region53: #{tpu_custom_call.1} parent=5 // pred_check
        %p698 = pneg %p697
      $region54: #{tpu_custom_call.1} parent=5 // pred_check_branch
        %700 = sbr.rel (%p698) target = $region56
      $region55: #{tpu_custom_call.1} parent=5 // pred_region
        %s701 = ssub.s32 %s19, 2
        // Predicated region
        $region57: #{tpu_custom_call.1} parent=55 // pred_check
          %p702 = pneg %p142
        $region58: #{tpu_custom_call.1} parent=55 // pred_check_branch
          %704 = sbr.rel (%p702) target = $region60
        $region59: #{tpu_custom_call.1} parent=55 // pred_region
          %s705 = sand.u32 %s127, 1
          %s706 = scalar_lea.sflag [#allocation4], %s705
          %s707 = sand.u32 %s127, 1
          %s708 = smul.addr %s707, 16
          %s709 = scalar_lea.vmem [#allocation8], %s708
          %710 = dma.done %s706, 256
        $region60: #{tpu_custom_call.1} parent=55 // pred_fallthru
          _
      $region56: #{tpu_custom_call.1} parent=5 // pred_fallthru
        _
    $region6: #{tpu_custom_call.1} parent=1 // loop_footer
      %s23 = sadd.s32 1, %s19
    $region7: #{tpu_custom_call.1} parent=1 // loop_footer_branch
      %18 = sbr.rel target = $region3
    $region8: #{tpu_custom_call.1} parent=1 // loop_exit
      _
    %711 = vsyncpa [#allocation3], 1
    %s712 = scalar_lea.sflag [#allocation3], 1
    %713 = vsyncpa %s712, 1
    %714 = vsyncpa [#allocation6], 1
    %s715 = scalar_lea.sflag [#allocation6], 1
    %716 = vsyncpa %s715, 1
    %717 = vsyncpa [#allocation4], 1
    %s718 = scalar_lea.sflag [#allocation4], 1
    %719 = vsyncpa %s718, 1

// kernel: tpu_custom_call.1
$region0: #{tpu_custom_call.1}
  #allocation0 [shape = 'u32[]', space=smem, size = 0x4, offset = 0x4, fixed_abs, tag = 'smem constant byte address 0x4 - core index']
  #allocation1 [shape = 'u32[144,128]{1,0:T(1,128)}', space=vmem, size = 0x12000, scoped, tag = 'internal scratch']
  %s0 = inlined_call_operand.hbm [shape: f32[32,512], index: 0, kind: input, shape index: {}]
  %s1 = inlined_call_operand.hbm [shape: f32[32,128], index: 1, kind: input, shape index: {}]
  %s2 = inlined_call_operand.hbm [shape: bf16[512,128], index: 2, kind: input, shape index: {}]
  %s3 = inlined_call_operand.vmem [shape: f32[3,128], index: 3, kind: input, shape index: {}]
  %s4 = inlined_call_operand.hbm [shape: f32[32,128], index: 4, kind: output, shape index: {}]
  %s5 = sld [smem:[#allocation0]]
  $region61: #{tpu_custom_call.1} parent=0
    _
  %s7 = ssub.s32 1, %s5
  %s8 = scalar_select 0, %s7, %s5
  $region1: #{tpu_custom_call.1} parent=0
    #allocation2 [shape = 'u8[65536]{0}', space=vmem, size = 0x10000, scoped, tag = 'input window, operand 0']
    #allocation3 [shape = 's32[2]{0}', space=sflag, size = 0x8, scoped, tag = 'scoped memory for tpu_custom_call.1']
    #allocation4 [shape = 's32[2]{0}', space=sflag, size = 0x8, scoped, tag = 'scoped memory for tpu_custom_call.1']
    #allocation5 [shape = 'u8[16384]{0}', space=vmem, size = 0x4000, scoped, tag = 'input window, operand 1']
    #allocation6 [shape = 's32[2]{0}', space=sflag, size = 0x8, scoped, tag = 'scoped memory for tpu_custom_call.1']
    #allocation7 [shape = 'u8[131072]{0}', space=vmem, size = 0x20000, scoped, tag = 'input window, operand 2, single buffered']
    #allocation8 [shape = 'u8[16384]{0}', space=vmem, size = 0x4000, scoped, tag = 'output window, operand 0']
    %9 = vsyncpa [#allocation3], 0
    %s10 = scalar_lea.sflag [#allocation3], 1
    %11 = vsyncpa %s10, 0
    %12 = vsyncpa [#allocation6], 0
    %s13 = scalar_lea.sflag [#allocation6], 1
    %14 = vsyncpa %s13, 0
    %15 = vsyncpa [#allocation4], 0
    %s16 = scalar_lea.sflag [#allocation4], 1
    %17 = vsyncpa %s16, 0
    loop: start=0, step=1, limit=4
    $region2: #{tpu_custom_call.1} parent=1 // loop_pre_header
      _
    $region3: #{tpu_custom_call.1} parent=1 // loop_header
      %s19 = sphi 0, %s23
      %p20 = scmp.ge.s32.totalorder %s19, 4
      %s29 = sphi 0, %s31
      %s32 = sphi 0, %s29
      %s33 = sphi 0, %s32
      %s49 = sphi 0, %s33
      %s55 = sphi 0, %s57
      %s58 = sphi 0, %s55
      %s59 = sphi 0, %s58
      %s75 = sphi 0, %s59
      %s79 = sphi 0, %s79
      %s81 = sphi 0, %s79
      %s82 = sphi 0, %s81
      %s96 = sphi 0, %s82
      %s100 = sphi 0, %s100
      %s102 = sphi 0, %s100
      %s103 = sphi 0, %s102
      %s117 = sphi 0, %s103
      %s123 = sphi 0, %s125
      %s126 = sphi 0, %s123
      %s127 = sphi 0, %s126
      %s143 = sphi 0, %s127
    $region4: #{tpu_custom_call.1} parent=1 // loop_header_branch
      %22 = sbr.rel (%p20) target = $region8
    $region5: #{tpu_custom_call.1} parent=1 // loop_body
      %s24 = ssub.s32 %s19, 1
      %s25 = ssub.s32 %s19, 2
      %s26 = sadd.s32 %s19, 1
      %s27 = ssub.s32 %s19, %s26
      %p28 = scmp.eq.s32.totalorder %s27, 0
      %s30 = sadd.s32 %s29, 1
      %s31 = scalar_select %p28, %s29, %s30
      %p34 = pneg %p28
      %p35 = scmp.eq.s32.totalorder %s19, 1
      %p36 = por %p34, %p35
      %p37 = scmp.ne.s32.totalorder %s29, %s32
      %p38 = scmp.eq.s32.totalorder %s19, 0
      %p39 = por %p37, %p38
      %p40 = scmp.ne.s32.totalorder %s29, %s32
      %p41 = scmp.eq.s32.totalorder %s24, 1
      %p42 = por %p40, %p41
      %p43 = scmp.ne.s32.totalorder %s32, %s33
      %p44 = scmp.eq.s32.totalorder %s24, 0
      %p45 = por %p43, %p44
      %p46 = scmp.ne.s32.totalorder %s32, %s33
      %p47 = scmp.eq.s32.totalorder %s25, 1
      %p48 = por %p46, %p47
      %p50 = scmp.ne.s32.totalorder %s33, %s49
      %p51 = scmp.eq.s32.totalorder %s25, 0
      %p52 = por %p50, %p51
      %s53 = ssub.s32 %s19, %s26
      %p54 = scmp.eq.s32.totalorder %s53, 0
      %s56 = sadd.s32 %s55, 1
      %s57 = scalar_select %p54, %s55, %s56
      %p60 = pneg %p54
      %p61 = scmp.eq.s32.totalorder %s19, 1
      %p62 = por %p60, %p61
      %p63 = scmp.ne.s32.totalorder %s55, %s58
      %p64 = scmp.eq.s32.totalorder %s19, 0
      %p65 = por %p63, %p64
      %p66 = scmp.ne.s32.totalorder %s55, %s58
      %p67 = scmp.eq.s32.totalorder %s24, 1
      %p68 = por %p66, %p67
      %p69 = scmp.ne.s32.totalorder %s58, %s59
      %p70 = scmp.eq.s32.totalorder %s24, 0
      %p71 = por %p69, %p70
      %p72 = scmp.ne.s32.totalorder %s58, %s59
      %p73 = scmp.eq.s32.totalorder %s25, 1
      %p74 = por %p72, %p73
      %p76 = scmp.ne.s32.totalorder %s59, %s75
      %p77 = scmp.eq.s32.totalorder %s25, 0
      %p78 = por %p76, %p77
      %s80 = sadd.s32 %s79, 1
      %p83 = scmp.eq.s32.totalorder %s19, 1
      %p84 = scmp.ne.s32.totalorder %s79, %s81
      %p85 = scmp.eq.s32.totalorder %s19, 0
      %p86 = por %p84, %p85
      %p87 = scmp.ne.s32.totalorder %s79, %s81
      %p88 = scmp.eq.s32.totalorder %s24, 1
      %p89 = por %p87, %p88
      %p90 = scmp.ne.s32.totalorder %s81, %s82
      %p91 = scmp.eq.s32.totalorder %s24, 0
      %p92 = por %p90, %p91
      %p93 = scmp.ne.s32.totalorder %s81, %s82
      %p94 = scmp.eq.s32.totalorder %s25, 1
      %p95 = por %p93, %p94
      %p97 = scmp.ne.s32.totalorder %s82, %s96
      %p98 = scmp.eq.s32.totalorder %s25, 0
      %p99 = por %p97, %p98
      %s101 = sadd.s32 %s100, 1
      %p104 = scmp.eq.s32.totalorder %s19, 1
      %p105 = scmp.ne.s32.totalorder %s100, %s102
      %p106 = scmp.eq.s32.totalorder %s19, 0
      %p107 = por %p105, %p106
      %p108 = scmp.ne.s32.totalorder %s100, %s102
      %p109 = scmp.eq.s32.totalorder %s24, 1
      %p110 = por %p108, %p109
      %p111 = scmp.ne.s32.totalorder %s102, %s103
      %p112 = scmp.eq.s32.totalorder %s24, 0
      %p113 = por %p111, %p112
      %p114 = scmp.ne.s32.totalorder %s102, %s103
      %p115 = scmp.eq.s32.totalorder %s25, 1
      %p116 = por %p114, %p115
      %p118 = scmp.ne.s32.totalorder %s103, %s117
      %p119 = scmp.eq.s32.totalorder %s25, 0
      %p120 = por %p118, %p119
      %s121 = ssub.s32 %s19, %s26
      %p122 = scmp.eq.s32.totalorder %s121, 0
      %s124 = sadd.s32 %s123, 1
      %s125 = scalar_select %p122, %s123, %s124
      %p128 = pneg %p122
      %p129 = scmp.eq.s32.totalorder %s19, 1
      %p130 = por %p128, %p129
      %p131 = scmp.ne.s32.totalorder %s123, %s126
      %p132 = scmp.eq.s32.totalorder %s19, 0
      %p133 = por %p131, %p132
      %p134 = scmp.ne.s32.totalorder %s123, %s126
      %p135 = scmp.eq.s32.totalorder %s24, 1
      %p136 = por %p134, %p135
      %p137 = scmp.ne.s32.totalorder %s126, %s127
      %p138 = scmp.eq.s32.totalorder %s24, 0
      %p139 = por %p137, %p138
      %p140 = scmp.ne.s32.totalorder %s126, %s127
      %p141 = scmp.eq.s32.totalorder %s25, 1
      %p142 = por %p140, %p141
      %p144 = scmp.ne.s32.totalorder %s127, %s143
      %p145 = scmp.eq.s32.totalorder %s25, 0
      %p146 = por %p144, %p145
      %p147 = scmp.le.s32.totalorder 1, %s19
      %p148 = scmp.lt.s32.totalorder %s19, 3
      %p149 = pnand %p147, %p148
      %p150 = pneg %p149
      // Predicated region
      $region9: #{tpu_custom_call.1} parent=5 // pred_check
        _
      $region10: #{tpu_custom_call.1} parent=5 // pred_check_branch
        %152 = sbr.rel (%p149) target = $region12
      $region11: #{tpu_custom_call.1} parent=5 // pred_region
        %s153 = ssub.s32 %s19, 1
        // Predicated region
        $region13: #{tpu_custom_call.1} parent=11 // pred_check
          %p154 = pneg %p92
        $region14: #{tpu_custom_call.1} parent=11 // pred_check_branch
          %156 = sbr.rel (%p154) target = $region16
        $region15: #{tpu_custom_call.1} parent=11 // pred_region
          %s158 = ssub.s32 4096, 4096
          %159 = vsyncadd [#allocation6], %s158
          %s160 = sshll.u32 [#allocation7], 4
          %s161 = int_to_ptr.vmem [resolvable:$true] %s160
          %166 = dma.hbm_to_vmem [thread:$0]  %s2, 4096, %s161, [#allocation6], 64, 64, 4
        $region16: #{tpu_custom_call.1} parent=11 // pred_fallthru
          _
        // Predicated region
        $region17: #{tpu_custom_call.1} parent=11 // pred_check
          %p167 = pneg %p113
        $region18: #{tpu_custom_call.1} parent=11 // pred_check_branch
          %169 = sbr.rel (%p167) target = $region20
        $region19: #{tpu_custom_call.1} parent=11 // pred_region
          _
        $region20: #{tpu_custom_call.1} parent=11 // pred_fallthru
          _
      $region12: #{tpu_custom_call.1} parent=5 // pred_fallthru
        _
      %p170 = scmp.lt.s32.totalorder %s19, 2
      // Predicated region
      $region21: #{tpu_custom_call.1} parent=5 // pred_check
        %p171 = pneg %p170
      $region22: #{tpu_custom_call.1} parent=5 // pred_check_branch
        %173 = sbr.rel (%p171) target = $region24
      $region23: #{tpu_custom_call.1} parent=5 // pred_region
        // Predicated region
        $region25: #{tpu_custom_call.1} parent=23 // pred_check
          %p174 = pneg %p39
        $region26: #{tpu_custom_call.1} parent=23 // pred_check_branch
          %176 = sbr.rel (%p174) target = $region28
        $region27: #{tpu_custom_call.1} parent=23 // pred_region
          %s177 = sand.u32 %s29, 1
          %s178 = scalar_lea.sflag [#allocation3], %s177
          %s179 = sand.u32 %s29, 1
          %s180 = smul.addr %s179, 64
          %s181 = scalar_lea.vmem [#allocation2], %s180
          %s182 = smul.u32 2, %s19
          %s184 = ssub.s32 1024, 1024
          %185 = vsyncadd %s178, %s184
          %s186 = smul.addr %s182, 4
          %s187 = smul.addr %s186, 128
          %s188 = scalar_lea.hbm %s0, %s187
          %s189 = sshll.u32 %s181, 4
          %s190 = int_to_ptr.vmem [resolvable:$true] %s189
          %195 = dma.hbm_to_vmem [thread:$0]  %s188, 1024, %s190, %s178, 512, 512, 32
        $region28: #{tpu_custom_call.1} parent=23 // pred_fallthru
          _
        // Predicated region
        $region29: #{tpu_custom_call.1} parent=23 // pred_check
          %p196 = pneg %p65
        $region30: #{tpu_custom_call.1} parent=23 // pred_check_branch
          %198 = sbr.rel (%p196) target = $region32
        $region31: #{tpu_custom_call.1} parent=23 // pred_region
          %s199 = sand.u32 %s19, 1
          %s200 = scalar_lea.sflag [#allocation6], %s199
          %s201 = sand.u32 %s55, 1
          %s202 = smul.addr %s201, 16
          %s203 = scalar_lea.vmem [#allocation5], %s202
          %s204 = smul.u32 2, %s19
          %s206 = ssub.s32 256, 256
          %207 = vsyncadd %s200, %s206
          %s208 = smul.addr %s204, 128
          %s209 = scalar_lea.hbm %s1, %s208
          %s210 = sshll.u32 %s203, 4
          %s211 = int_to_ptr.vmem [resolvable:$true] %s210
          %216 = dma.hbm_to_vmem [thread:$0]  %s209, 256, %s211, %s200, 128, 128, 8
        $region32: #{tpu_custom_call.1} parent=23 // pred_fallthru
          _
      $region24: #{tpu_custom_call.1} parent=5 // pred_fallthru
        _
      %p217 = scmp.le.s32.totalorder 1, %s19
      %p218 = scmp.lt.s32.totalorder %s19, 3
      %p219 = pnand %p217, %p218
      %p220 = pneg %p219
      // Predicated region
      $region33: #{tpu_custom_call.1} parent=5 // pred_check
        _
      $region34: #{tpu_custom_call.1} parent=5 // pred_check_branch
        %222 = sbr.rel (%p219) target = $region36
      $region35: #{tpu_custom_call.1} parent=5 // pred_region
        %s223 = ssub.s32 %s19, 1
        %s224 = sand.u32 %s32, 1
        %s225 = scalar_lea.sflag [#allocation3], %s224
        %s226 = sand.u32 %s32, 1
        %s227 = smul.addr %s226, 64
        %s228 = scalar_lea.vmem [#allocation2], %s227
        // Predicated region
        $region37: #{tpu_custom_call.1} parent=35 // pred_check
          %p229 = pneg %p45
        $region38: #{tpu_custom_call.1} parent=35 // pred_check_branch
          %231 = sbr.rel (%p229) target = $region40
        $region39: #{tpu_custom_call.1} parent=35 // pred_region
          %232 = dma.done %s225, 1024
        $region40: #{tpu_custom_call.1} parent=35 // pred_fallthru
          _
        %s233 = sand.u32 %s24, 1
        %s234 = scalar_lea.sflag [#allocation6], %s233
        %s235 = sand.u32 %s58, 1
        %s236 = smul.addr %s235, 16
        %s237 = scalar_lea.vmem [#allocation5], %s236
        // Predicated region
        $region41: #{tpu_custom_call.1} parent=35 // pred_check
          %p238 = pneg %p71
        $region42: #{tpu_custom_call.1} parent=35 // pred_check_branch
          %240 = sbr.rel (%p238) target = $region44
        $region43: #{tpu_custom_call.1} parent=35 // pred_region
          %241 = dma.done %s234, 256
        $region44: #{tpu_custom_call.1} parent=35 // pred_fallthru
          _
        // Predicated region
        $region45: #{tpu_custom_call.1} parent=35 // pred_check
          %p242 = pneg %p92
        $region46: #{tpu_custom_call.1} parent=35 // pred_check_branch
          %244 = sbr.rel (%p242) target = $region48
        $region47: #{tpu_custom_call.1} parent=35 // pred_region
          %245 = dma.done [#allocation6], 4096
        $region48: #{tpu_custom_call.1} parent=35 // pred_fallthru
          _
        %s246 = sand.u32 %s32, 1
        %s247 = scalar_lea.sflag [#allocation3], %s246
        %s248 = sand.u32 %s32, 1
        %s249 = smul.addr %s248, 64
        %s250 = scalar_lea.vmem [#allocation2], %s249
        %p251 = pneg %p45
        %p252 = pneg %p42
        %s253 = sand.u32 %s24, 1
        %s254 = scalar_lea.sflag [#allocation6], %s253
        %s255 = sand.u32 %s58, 1
        %s256 = smul.addr %s255, 16
        %s257 = scalar_lea.vmem [#allocation5], %s256
        %p258 = pneg %p71
        %p259 = pneg %p68
        %p260 = pneg %p92
        %p261 = pneg %p89
        %p262 = pneg %p113
        %p263 = pneg %p110
        %p264 = pneg %p139
        %p265 = pneg %p136
        %s266 = sand.u32 %s126, 1
        %s267 = scalar_lea.sflag [#allocation4], %s266
        %s268 = sand.u32 %s126, 1
        %s269 = smul.addr %s268, 16
        %s270 = scalar_lea.vmem [#allocation8], %s269
        %s271 = smul.u32 2, %s24
        %s272 = smul.u32 2, %s24
        %s273 = smul.u32 2, %s24
        %v275 = vld [vmem:[%s228] sm:$0xff]
        %v276 = vld [vmem:[%s228 + $0x8] sm:$0xff]
        %v277 = vld [vmem:[%s228 + $0x10] sm:$0xff]
        %v278 = vld [vmem:[%s228 + $0x18] sm:$0xff]
        %v279 = vld [vmem:[%s228 + $0x20] sm:$0xff]
        %v280 = vld [vmem:[%s228 + $0x28] sm:$0xff]
        %v281 = vld [vmem:[%s228 + $0x30] sm:$0xff]
        %v282 = vld [vmem:[%s228 + $0x38] sm:$0xff]
        %v283 = vpack.c.bf16 %v279, %v275
        %v284 = vpack.c.bf16 %v280, %v276
        %v285 = vpack.c.bf16 %v281, %v277
        %v286 = vpack.c.bf16 %v282, %v278
        %v287 = vld [vmem:[#allocation7] sm:$0xf]
        %v288 = vld [vmem:[#allocation7 + $0x4] sm:$0xf]
        %v289 = vld [vmem:[#allocation7 + $0x8] sm:$0xf]
        %v290 = vld [vmem:[#allocation7 + $0xc] sm:$0xf]
        %v291 = vld [vmem:[#allocation7 + $0x10] sm:$0xf]
        %v292 = vld [vmem:[#allocation7 + $0x14] sm:$0xf]
        %v293 = vld [vmem:[#allocation7 + $0x18] sm:$0xf]
        %v294 = vld [vmem:[#allocation7 + $0x1c] sm:$0xf]
        %v295 = vld [vmem:[#allocation7 + $0x20] sm:$0xf]
        %v296 = vld [vmem:[#allocation7 + $0x24] sm:$0xf]
        %v297 = vld [vmem:[#allocation7 + $0x28] sm:$0xf]
        %v298 = vld [vmem:[#allocation7 + $0x2c] sm:$0xf]
        %v299 = vld [vmem:[#allocation7 + $0x30] sm:$0xf]
        %v300 = vld [vmem:[#allocation7 + $0x34] sm:$0xf]
        %v301 = vld [vmem:[#allocation7 + $0x38] sm:$0xf]
        %v302 = vld [vmem:[#allocation7 + $0x3c] sm:$0xf]
        %v303 = vld [vmem:[#allocation7 + $0x40] sm:$0xf]
        %v304 = vld [vmem:[#allocation7 + $0x44] sm:$0xf]
        %v305 = vld [vmem:[#allocation7 + $0x48] sm:$0xf]
        %v306 = vld [vmem:[#allocation7 + $0x4c] sm:$0xf]
        %v307 = vld [vmem:[#allocation7 + $0x50] sm:$0xf]
        %v308 = vld [vmem:[#allocation7 + $0x54] sm:$0xf]
        %v309 = vld [vmem:[#allocation7 + $0x58] sm:$0xf]
        %v310 = vld [vmem:[#allocation7 + $0x5c] sm:$0xf]
        %v311 = vld [vmem:[#allocation7 + $0x60] sm:$0xf]
        %v312 = vld [vmem:[#allocation7 + $0x64] sm:$0xf]
        %v313 = vld [vmem:[#allocation7 + $0x68] sm:$0xf]
        %v314 = vld [vmem:[#allocation7 + $0x6c] sm:$0xf]
        %v315 = vld [vmem:[#allocation7 + $0x70] sm:$0xf]
        %v316 = vld [vmem:[#allocation7 + $0x74] sm:$0xf]
        %v317 = vld [vmem:[#allocation7 + $0x78] sm:$0xf]
        %v318 = vld [vmem:[#allocation7 + $0x7c] sm:$0xf]
        %v319 = vld [vmem:[#allocation7 + $0x80] sm:$0xf]
        %v320 = vld [vmem:[#allocation7 + $0x84] sm:$0xf]
        %v321 = vld [vmem:[#allocation7 + $0x88] sm:$0xf]
        %v322 = vld [vmem:[#allocation7 + $0x8c] sm:$0xf]
        %v323 = vld [vmem:[#allocation7 + $0x90] sm:$0xf]
        %v324 = vld [vmem:[#allocation7 + $0x94] sm:$0xf]
        %v325 = vld [vmem:[#allocation7 + $0x98] sm:$0xf]
        %v326 = vld [vmem:[#allocation7 + $0x9c] sm:$0xf]
        %v327 = vld [vmem:[#allocation7 + $0xa0] sm:$0xf]
        %v328 = vld [vmem:[#allocation7 + $0xa4] sm:$0xf]
        %v329 = vld [vmem:[#allocation7 + $0xa8] sm:$0xf]
        %v330 = vld [vmem:[#allocation7 + $0xac] sm:$0xf]
        %v331 = vld [vmem:[#allocation7 + $0xb0] sm:$0xf]
        %v332 = vld [vmem:[#allocation7 + $0xb4] sm:$0xf]
        %v333 = vld [vmem:[#allocation7 + $0xb8] sm:$0xf]
        %v334 = vld [vmem:[#allocation7 + $0xbc] sm:$0xf]
        %v335 = vld [vmem:[#allocation7 + $0xc0] sm:$0xf]
        %v336 = vld [vmem:[#allocation7 + $0xc4] sm:$0xf]
        %v337 = vld [vmem:[#allocation7 + $0xc8] sm:$0xf]
        %v338 = vld [vmem:[#allocation7 + $0xcc] sm:$0xf]
        %v339 = vld [vmem:[#allocation7 + $0xd0] sm:$0xf]
        %v340 = vld [vmem:[#allocation7 + $0xd4] sm:$0xf]
        %v341 = vld [vmem:[#allocation7 + $0xd8] sm:$0xf]
        %v342 = vld [vmem:[#allocation7 + $0xdc] sm:$0xf]
        %v343 = vld [vmem:[#allocation7 + $0xe0] sm:$0xf]
        %v344 = vld [vmem:[#allocation7 + $0xe4] sm:$0xf]
        %v345 = vld [vmem:[#allocation7 + $0xe8] sm:$0xf]
        %v346 = vld [vmem:[#allocation7 + $0xec] sm:$0xf]
        %v347 = vld [vmem:[#allocation7 + $0xf0] sm:$0xf]
        %v348 = vld [vmem:[#allocation7 + $0xf4] sm:$0xf]
        %v349 = vld [vmem:[#allocation7 + $0xf8] sm:$0xf]
        %v350 = vld [vmem:[#allocation7 + $0xfc] sm:$0xf]
        %v351 = vld [vmem:[%s3] sm:$0x7]
        %v352 = vlaneseq
        %v353 = vshrl.u32 %v352, 7
        %v354 = vsub.s32 0, %v353
        %v355 = vrot.slane %v351, %v354
        %v420 = vunpack.c.l.b16 %v287
        %v421 = vunpack.c.l.b16 %v288
        %v422 = vunpack.c.l.b16 %v289
        %v423 = vunpack.c.l.b16 %v290
        %v424 = vunpack.c.l.b16 %v291
        %v425 = vunpack.c.l.b16 %v292
        %v426 = vunpack.c.l.b16 %v293
        %v427 = vunpack.c.l.b16 %v294
        %v428 = vunpack.c.l.b16 %v295
        %v429 = vunpack.c.l.b16 %v296
        %v430 = vunpack.c.l.b16 %v297
        %v431 = vunpack.c.l.b16 %v298
        %v432 = vunpack.c.l.b16 %v299
        %v433 = vunpack.c.l.b16 %v300
        %v434 = vunpack.c.l.b16 %v301
        %v435 = vunpack.c.l.b16 %v302
        %v436 = vunpack.c.l.b16 %v303
        %v437 = vunpack.c.l.b16 %v304
        %v438 = vunpack.c.l.b16 %v305
        %v439 = vunpack.c.l.b16 %v306
        %v440 = vunpack.c.l.b16 %v307
        %v441 = vunpack.c.l.b16 %v308
        %v442 = vunpack.c.l.b16 %v309
        %v443 = vunpack.c.l.b16 %v310
        %v444 = vunpack.c.l.b16 %v311
        %v445 = vunpack.c.l.b16 %v312
        %v446 = vunpack.c.l.b16 %v313
        %v447 = vunpack.c.l.b16 %v314
        %v448 = vunpack.c.l.b16 %v315
        %v449 = vunpack.c.l.b16 %v316
        %v450 = vunpack.c.l.b16 %v317
        %v451 = vunpack.c.l.b16 %v318
        %v452 = vunpack.c.l.b16 %v319
        %v453 = vunpack.c.l.b16 %v320
        %v454 = vunpack.c.l.b16 %v321
        %v455 = vunpack.c.l.b16 %v322
        %v456 = vunpack.c.l.b16 %v323
        %v457 = vunpack.c.l.b16 %v324
        %v458 = vunpack.c.l.b16 %v325
        %v459 = vunpack.c.l.b16 %v326
        %v460 = vunpack.c.l.b16 %v327
        %v461 = vunpack.c.l.b16 %v328
        %v462 = vunpack.c.l.b16 %v329
        %v463 = vunpack.c.l.b16 %v330
        %v464 = vunpack.c.l.b16 %v331
        %v465 = vunpack.c.l.b16 %v332
        %v466 = vunpack.c.l.b16 %v333
        %v467 = vunpack.c.l.b16 %v334
        %v468 = vunpack.c.l.b16 %v335
        %v469 = vunpack.c.l.b16 %v336
        %v470 = vunpack.c.l.b16 %v337
        %v471 = vunpack.c.l.b16 %v338
        %v472 = vunpack.c.l.b16 %v339
        %v473 = vunpack.c.l.b16 %v340
        %v474 = vunpack.c.l.b16 %v341
        %v475 = vunpack.c.l.b16 %v342
        %v476 = vunpack.c.l.b16 %v343
        %v477 = vunpack.c.l.b16 %v344
        %v478 = vunpack.c.l.b16 %v345
        %v479 = vunpack.c.l.b16 %v346
        %v480 = vunpack.c.l.b16 %v347
        %v481 = vunpack.c.l.b16 %v348
        %v482 = vunpack.c.l.b16 %v349
        %v483 = vunpack.c.l.b16 %v350
        %v484 = vpack.c.b16 %v421, %v420
        %v485 = vpack.c.b16 %v423, %v422
        %v486 = vpack.c.b16 %v425, %v424
        %v487 = vpack.c.b16 %v427, %v426
        %v488 = vpack.c.b16 %v429, %v428
        %v489 = vpack.c.b16 %v431, %v430
        %v490 = vpack.c.b16 %v433, %v432
        %v491 = vpack.c.b16 %v435, %v434
        %v492 = vpack.c.b16 %v437, %v436
        %v493 = vpack.c.b16 %v439, %v438
        %v494 = vpack.c.b16 %v441, %v440
        %v495 = vpack.c.b16 %v443, %v442
        %v496 = vpack.c.b16 %v445, %v444
        %v497 = vpack.c.b16 %v447, %v446
        %v498 = vpack.c.b16 %v449, %v448
        %v499 = vpack.c.b16 %v451, %v450
        %v500 = vpack.c.b16 %v453, %v452
        %v501 = vpack.c.b16 %v455, %v454
        %v502 = vpack.c.b16 %v457, %v456
        %v503 = vpack.c.b16 %v459, %v458
        %v504 = vpack.c.b16 %v461, %v460
        %v505 = vpack.c.b16 %v463, %v462
        %v506 = vpack.c.b16 %v465, %v464
        %v507 = vpack.c.b16 %v467, %v466
        %v508 = vpack.c.b16 %v469, %v468
        %v509 = vpack.c.b16 %v471, %v470
        %v510 = vpack.c.b16 %v473, %v472
        %v511 = vpack.c.b16 %v475, %v474
        %v512 = vpack.c.b16 %v477, %v476
        %v513 = vpack.c.b16 %v479, %v478
        %v514 = vpack.c.b16 %v481, %v480
        %v515 = vpack.c.b16 %v483, %v482
        %548 = vmatprep.subr.bf16.mxu0 0
        %549 = vmatpush1.bf16.msra.mxu0 %v484
        %550 = vmatprep.subr.bf16.mxu0 0
        %551 = vmatpush1.bf16.msra.mxu0 %v485
        %552 = vmatprep.subr.bf16.mxu0 0
        %553 = vmatpush1.bf16.msra.mxu0 %v486
        %554 = vmatprep.subr.bf16.mxu0 0
        %555 = vmatpush1.bf16.msra.mxu0 %v487
        %556 = vmatprep.subr.bf16.mxu0 0
        %557 = vmatpush1.bf16.msra.mxu0 %v488
        %558 = vmatprep.subr.bf16.mxu0 0
        %559 = vmatpush1.bf16.msra.mxu0 %v489
        %560 = vmatprep.subr.bf16.mxu0 0
        %561 = vmatpush1.bf16.msra.mxu0 %v490
        %562 = vmatprep.subr.bf16.mxu0 0
        %563 = vmatpush1.bf16.msra.mxu0 %v491
        %564 = vmatprep.subr.bf16.mxu0 0
        %565 = vmatpush1.bf16.msra.mxu0 %v492
        %566 = vmatprep.subr.bf16.mxu0 0
        %567 = vmatpush1.bf16.msra.mxu0 %v493
        %568 = vmatprep.subr.bf16.mxu0 0
        %569 = vmatpush1.bf16.msra.mxu0 %v494
        %570 = vmatprep.subr.bf16.mxu0 0
        %571 = vmatpush1.bf16.msra.mxu0 %v495
        %572 = vmatprep.subr.bf16.mxu0 0
        %573 = vmatpush1.bf16.msra.mxu0 %v496
        %574 = vmatprep.subr.bf16.mxu0 0
        %575 = vmatpush1.bf16.msra.mxu0 %v497
        %576 = vmatprep.subr.bf16.mxu0 0
        %577 = vmatpush1.bf16.msra.mxu0 %v498
        %578 = vmatprep.subr.bf16.mxu0 0
        %579 = vmatpush1.bf16.msra.mxu0 %v499
        %580 = vmatprep.mubr.bf16.mxu0 %v284
        %581 = vmatmul.mubr.bf16.gmra.mrb[0].mxu0 %v283
        %v582 = vpop.f32.mrb[0].mxu0
        %v583 = vadd.f32 %v355, %v582
        %v584 = vpop.f32.mrb[0].mxu0
        %v585 = vpop.f32.mrb[0].mxu0
        %v586 = vadd.f32 %v355, %v585
        %v587 = vpop.f32.mrb[0].mxu0
        %588 = vdwg.mxu0
        %589 = vmatprep.subr.bf16.mxu0 0
        %590 = vmatpush1.bf16.msra.mxu0 %v500
        %591 = vmatprep.subr.bf16.mxu0 0
        %592 = vmatpush1.bf16.msra.mxu0 %v501
        %593 = vmatprep.subr.bf16.mxu0 0
        %594 = vmatpush1.bf16.msra.mxu0 %v502
        %595 = vmatprep.subr.bf16.mxu0 0
        %596 = vmatpush1.bf16.msra.mxu0 %v503
        %597 = vmatprep.subr.bf16.mxu0 0
        %598 = vmatpush1.bf16.msra.mxu0 %v504
        %599 = vmatprep.subr.bf16.mxu0 0
        %600 = vmatpush1.bf16.msra.mxu0 %v505
        %601 = vmatprep.subr.bf16.mxu0 0
        %602 = vmatpush1.bf16.msra.mxu0 %v506
        %603 = vmatprep.subr.bf16.mxu0 0
        %604 = vmatpush1.bf16.msra.mxu0 %v507
        %605 = vmatprep.subr.bf16.mxu0 0
        %606 = vmatpush1.bf16.msra.mxu0 %v508
        %607 = vmatprep.subr.bf16.mxu0 0
        %608 = vmatpush1.bf16.msra.mxu0 %v509
        %609 = vmatprep.subr.bf16.mxu0 0
        %610 = vmatpush1.bf16.msra.mxu0 %v510
        %611 = vmatprep.subr.bf16.mxu0 0
        %612 = vmatpush1.bf16.msra.mxu0 %v511
        %613 = vmatprep.subr.bf16.mxu0 0
        %614 = vmatpush1.bf16.msra.mxu0 %v512
        %615 = vmatprep.subr.bf16.mxu0 0
        %616 = vmatpush1.bf16.msra.mxu0 %v513
        %617 = vmatprep.subr.bf16.mxu0 0
        %618 = vmatpush1.bf16.msra.mxu0 %v514
        %619 = vmatprep.subr.bf16.mxu0 0
        %620 = vmatpush1.bf16.msra.mxu0 %v515
        %621 = vmatprep.mubr.bf16.mxu0 %v286
        %622 = vmatmul.mubr.bf16.gmra.mrb[0].mxu0 %v285
        %v623 = vpop.f32.mrb[0].mxu0
        %v624 = vadd.f32 %v583, %v623
        %v625 = vpop.f32.mrb[0].mxu0
        %v626 = vpop.f32.mrb[0].mxu0
        %v627 = vadd.f32 %v586, %v626
        %v628 = vpop.f32.mrb[0].mxu0
        %629 = vdwg.mxu0
        %v630 = vld [vmem:[%s237] sm:$0xff]
        %v631 = vld [vmem:[%s237 + $0x8] sm:$0xff]
        %v632 = vadd.f32 %v624, %v630
        %v633 = vadd.f32 %v627, %v631
        %634 = vadd.xlane.f32.xlu0 %v632
        %v635 = vpop.xlane.xlu0 %634
        %636 = vadd.xlane.f32.xlu0 %v633
        %v637 = vpop.xlane.xlu0 %636
        %v638 = vmul.f32 %v635, 0.0078125
        %v639 = vmul.f32 %v637, 0.0078125
        %v640 = vmul.f32 %v632, %v632
        %v641 = vmul.f32 %v633, %v633
        %642 = vadd.xlane.f32.xlu0 %v640
        %v643 = vpop.xlane.xlu0 %642
        %644 = vadd.xlane.f32.xlu0 %v641
        %v645 = vpop.xlane.xlu0 %644
        %v646 = vmul.f32 %v643, 0.0078125
        %v647 = vmul.f32 %v645, 0.0078125
        %v648 = vmul.f32 %v638, %v638
        %v649 = vmul.f32 %v639, %v639
        %v650 = vsub.f32 %v646, %v648
        %v651 = vsub.f32 %v647, %v649
        %v652 = vmax.f32 %v650, 0.0
        %v653 = vmax.f32 %v651, 0.0
        %v654 = vadd.f32 %v652, 1e-12
        %v655 = vadd.f32 %v653, 1e-12
        %v656 = vrsqrt.pop %v654
        %v657 = vrsqrt.pop %v655
        %v658 = vsub.f32 %v632, %v638
        %v659 = vsub.f32 %v633, %v639
        %v660 = vmul.f32 %v658, %v656
        %v661 = vmul.f32 %v659, %v657
        %v662 = vlaneseq
        %v663 = vshrl.u32 %v662, 7
        %v664 = vsub.s32 1, %v663
        %v665 = vrot.slane %v351, %v664
        %v666 = vmul.f32 %v660, %v665
        %v667 = vmul.f32 %v661, %v665
        %v668 = vlaneseq
        %v669 = vshrl.u32 %v668, 7
        %v670 = vsub.s32 2, %v669
        %v671 = vrot.slane %v351, %v670
        %v672 = vadd.f32 %v666, %v671
        %v673 = vadd.f32 %v667, %v671
        %674 = vst [vmem:[%s270] sm:$0xff] %v672
        %675 = vst [vmem:[%s270 + $0x8] sm:$0xff] %v673
        %s676 = sand.u32 %s126, 1
        %s677 = scalar_lea.sflag [#allocation4], %s676
        %s678 = sand.u32 %s126, 1
        %s679 = smul.addr %s678, 16
        %s680 = scalar_lea.vmem [#allocation8], %s679
        // Predicated region
        $region49: #{tpu_custom_call.1} parent=35 // pred_check
          %p681 = pneg %p136
        $region50: #{tpu_custom_call.1} parent=35 // pred_check_branch
          %683 = sbr.rel (%p681) target = $region52
        $region51: #{tpu_custom_call.1} parent=35 // pred_region
          %s684 = smul.u32 2, %s24
          %s686 = ssub.s32 256, 256
          %687 = vsyncadd %s677, %s686
          %s688 = smul.addr %s684, 128
          %s689 = scalar_lea.hbm %s4, %s688
          %s690 = sshll.u32 %s680, 4
          %s691 = int_to_ptr.vmem [resolvable:$true] %s690
          %696 = dma.vmem_to_hbm [thread:$0]  %s691, 256, %s689, %s677, 128, 128, 8
        $region52: #{tpu_custom_call.1} parent=35 // pred_fallthru
          _
      $region36: #{tpu_custom_call.1} parent=5 // pred_fallthru
        _
      %p697 = scmp.le.s32.totalorder 2, %s19
      // Predicated region
      $region53: #{tpu_custom_call.1} parent=5 // pred_check
        %p698 = pneg %p697
      $region54: #{tpu_custom_call.1} parent=5 // pred_check_branch
        %700 = sbr.rel (%p698) target = $region56
      $region55: #{tpu_custom_call.1} parent=5 // pred_region
        %s701 = ssub.s32 %s19, 2
        // Predicated region
        $region57: #{tpu_custom_call.1} parent=55 // pred_check
          %p702 = pneg %p142
        $region58: #{tpu_custom_call.1} parent=55 // pred_check_branch
          %704 = sbr.rel (%p702) target = $region60
        $region59: #{tpu_custom_call.1} parent=55 // pred_region
          %s705 = sand.u32 %s127, 1
          %s706 = scalar_lea.sflag [#allocation4], %s705
          %s707 = sand.u32 %s127, 1
          %s708 = smul.addr %s707, 16
          %s709 = scalar_lea.vmem [#allocation8], %s708
          %710 = dma.done %s706, 256
        $region60: #{tpu_custom_call.1} parent=55 // pred_fallthru
          _
      $region56: #{tpu_custom_call.1} parent=5 // pred_fallthru
        _
    $region6: #{tpu_custom_call.1} parent=1 // loop_footer
      %s23 = sadd.s32 1, %s19
    $region7: #{tpu_custom_call.1} parent=1 // loop_footer_branch
      %18 = sbr.rel target = $region3
    $region8: #{tpu_custom_call.1} parent=1 // loop_exit
      _
    %711 = vsyncpa [#allocation3], 1
    %s712 = scalar_lea.sflag [#allocation3], 1
    %713 = vsyncpa %s712, 1
    %714 = vsyncpa [#allocation6], 1
    %s715 = scalar_lea.sflag [#allocation6], 1
    %716 = vsyncpa %s715, 1
    %717 = vsyncpa [#allocation4], 1
    %s718 = scalar_lea.sflag [#allocation4], 1
    %719 = vsyncpa %s718, 1

</llo_original>
